<compile_context>
chip_gen: v5e
topology: v5e:2x2
jax: 0.10.0
libtpu: 0.0.40
codegen_flags: <defaults>
</compile_context>

<pallas_src>
import functools

import jax
import jax.numpy as jnp
from jax import lax
from jax.experimental import pallas as pl
from jax.experimental.pallas import tpu as pltpu


# ----------------------------------------------------------------------------
# Fused Pallas kernel: entire SAGPool network for one graph per grid step.
# ----------------------------------------------------------------------------
def sagpool_net_kernel(a_ref, m_ref, x_ref,
                       c1w, c1b, p1w, p1b,
                       c2w, c2b, p2w, p2b,
                       c3w, c3b, p3w, p3b,
                       l1w, l1b, l2w, l2b, l3w, l3b,
                       o_ref, *, ratio):
    a0 = a_ref[0].astype(jnp.float32)          # [N, N] (bf16 in HBM -> f32 math)
    m0 = m_ref[0]                              # [N, 1]
    x0 = x_ref[0]                              # [N, F]
    n = a0.shape[0]
    nhid = c1w.shape[-1]

    # Built ONCE per graph, shared by all three levels (eye + tie-break).
    row_idx = lax.broadcasted_iota(jnp.int32, (n, n), 0)
    col_idx = lax.broadcasted_iota(jnp.int32, (n, n), 1)
    eye = (row_idx == col_idx).astype(jnp.float32)

    def level(x_in, mask, cw, cb, pw, pb):
        # ---- shared GCN normalization (built once, used by conv AND score) ----
        m_row = jnp.transpose(mask)                                 # [1, N]
        a_hat = a0 * mask * m_row + eye * mask                      # masked A + self loops
        deg = jnp.sum(a_hat, axis=1, keepdims=True)                 # [N, 1]
        inv_sqrt = jnp.where(deg > 0.0, lax.rsqrt(jnp.maximum(deg, 1e-12)), 0.0)
        a_norm = a_hat * inv_sqrt * jnp.transpose(inv_sqrt)         # [N, N]

        # ---- conv (relu) ----
        h = jnp.dot(a_norm,
                    jnp.dot(x_in, cw[...], preferred_element_type=jnp.float32),
                    preferred_element_type=jnp.float32) + cb[...]
        h = jnp.maximum(h, 0.0) * mask                              # [N, H]

        # ---- SAGPool score (GCNConv to width 1), stays in VMEM ----
        s = jnp.dot(a_norm,
                    jnp.dot(h, pw[...], preferred_element_type=jnp.float32),
                    preferred_element_type=jnp.float32) + pb[...]   # [N, 1]

        # ---- in-kernel top-k via comparison ranks (stable: ties by index) ----
        s_row = jnp.transpose(s)                                    # [1, N]
        better = (s_row > s) | ((s_row == s) & (col_idx < row_idx)) # [N, N]
        rank = jnp.sum(better.astype(jnp.float32) * m_row,
                       axis=1, keepdims=True)                       # [N, 1]
        num_active = jnp.sum(mask, axis=0, keepdims=True)           # [1, 1]
        k = jnp.ceil(ratio * num_active)                            # [1, 1]
        new_mask = jnp.where((rank < k) & (mask > 0.0), 1.0, 0.0)   # [N, 1]

        # ---- gating + global max / mean readout ----
        gated = h * jnp.tanh(s) * new_mask                          # [N, H]
        neg = jnp.where(new_mask > 0.0, gated, -1e30)
        gmax = jnp.max(neg, axis=0, keepdims=True)                  # [1, H]
        cnt = jnp.sum(new_mask, axis=0, keepdims=True)              # [1, 1]
        inv_cnt = pl.reciprocal(jnp.maximum(cnt, 1.0), approx=True) # EUP slot
        gmean = jnp.sum(gated, axis=0, keepdims=True) * inv_cnt     # [1, H]
        alive = jnp.where(cnt > 0.0, 1.0, 0.0)                      # empty-graph guard
        return gated, new_mask, gmax * alive, gmean * alive

    h1, m1, r1mx, r1mn = level(x0, m0, c1w, c1b, p1w, p1b)
    h2, m2, r2mx, r2mn = level(h1, m1, c2w, c2b, p2w, p2b)
    _, _, r3mx, r3mn = level(h2, m2, c3w, c3b, p3w, p3b)

    r_mx = r1mx + r2mx + r3mx                                       # [1, H]  (gmp half)
    r_mn = r1mn + r2mn + r3mn                                       # [1, H]  (gap half)

    # ---- MLP head: lin1 -> relu -> (dropout: identity) -> lin2 -> relu -> lin3 ----
    # lin1 split into the max/mean halves => no concatenation / narrow stores needed.
    hh = (jnp.dot(r_mx, l1w[0:nhid, :], preferred_element_type=jnp.float32)
          + jnp.dot(r_mn, l1w[nhid:2 * nhid, :], preferred_element_type=jnp.float32)
          + l1b[...])
    hh = jnp.maximum(hh, 0.0)
    # TODO(synk): dropout is the identity (eval-mode semantics).
    hh = jnp.maximum(
        jnp.dot(hh, l2w[...], preferred_element_type=jnp.float32) + l2b[...], 0.0)
    logits = jnp.dot(hh, l3w[...], preferred_element_type=jnp.float32) + l3b[...]

    zmax = jnp.max(logits, axis=-1, keepdims=True)
    z = logits - zmax
    lse = jnp.log(jnp.sum(jnp.exp(z), axis=-1, keepdims=True))
    o_ref[0] = z - lse                                              # [1, C]


# ----------------------------------------------------------------------------
# Wrapper: single pallas_call for the whole forward pass.
# ----------------------------------------------------------------------------
def forward(params, x, a0, mask0, ratio):
    B, N, _ = a0.shape
    F_in = x.shape[-1]
    C = params["lin3_w"].shape[-1]

    weight_names = ("conv1_w", "conv1_b", "pool1_w", "pool1_b",
                    "conv2_w", "conv2_b", "pool2_w", "pool2_b",
                    "conv3_w", "conv3_b", "pool3_w", "pool3_b",
                    "lin1_w", "lin1_b", "lin2_w", "lin2_b", "lin3_w", "lin3_b")
    weights = [params[n] for n in weight_names]

    def const_spec(shape):
        zeros = (0,) * len(shape)
        return pl.BlockSpec(shape, lambda i, _z=zeros: _z)

    out = pl.pallas_call(
        functools.partial(sagpool_net_kernel, ratio=ratio),
        out_shape=jax.ShapeDtypeStruct((B, 1, C), jnp.float32),
        grid=(B,),
        in_specs=[
            pl.BlockSpec((1, N, N), lambda i: (i, 0, 0)),      # adjacency (bf16)
            pl.BlockSpec((1, N, 1), lambda i: (i, 0, 0)),      # node mask
            pl.BlockSpec((1, N, F_in), lambda i: (i, 0, 0)),   # node features
        ] + [const_spec(w.shape) for w in weights],
        out_specs=pl.BlockSpec((1, 1, C), lambda i: (i, 0, 0)),
        compiler_params=pltpu.CompilerParams(
            dimension_semantics=("parallel",)),                # batch axis -> megacore/v7x TCs
    )(a0.astype(jnp.bfloat16), mask0, x, *weights)
    return out[:, 0, :]                                        # [B, C]


# ----------------------------------------------------------------------------
# Pure-JAX reference (dense math, same semantics) for a sanity check.
# ----------------------------------------------------------------------------
def forward_reference(params, x, a0, mask0, ratio):
    def gcn(m, feats, w, b):
        m_row = jnp.swapaxes(m, 1, 2)
        eye = jnp.eye(a0.shape[1], dtype=a0.dtype)[None]
        a_hat = a0 * m * m_row + eye * m
        deg = jnp.sum(a_hat, axis=2, keepdims=True)
        inv = jnp.where(deg > 0.0, 1.0 / jnp.sqrt(jnp.maximum(deg, 1e-12)), 0.0)
        a_norm = a_hat * inv * jnp.swapaxes(inv, 1, 2)
        return jnp.einsum("bij,bjf->bif", a_norm, feats @ w) + b

    m = mask0
    feats = x
    r_total = 0.0
    for lvl in (1, 2, 3):
        h = jax.nn.relu(gcn(m, feats, params[f"conv{lvl}_w"], params[f"conv{lvl}_b"])) * m
        s = gcn(m, h, params[f"pool{lvl}_w"], params[f"pool{lvl}_b"])
        sc, mk = s[..., 0], m[..., 0]
        num_active = jnp.sum(mk, axis=1)
        k = jnp.ceil(ratio * num_active)
        masked_score = jnp.where(mk > 0.0, sc, -jnp.inf)
        order = jnp.argsort(-masked_score, axis=1)
        ranks = jnp.argsort(order, axis=1)
        new_m = ((ranks < k[:, None]) & (mk > 0.0)).astype(x.dtype)[..., None]
        gated = h * jnp.tanh(s) * new_m
        neg = jnp.where(new_m > 0.0, gated, -1e30)
        gmax = jnp.max(neg, axis=1)
        cnt = jnp.maximum(jnp.sum(new_m, axis=1), 1.0)
        gmean = jnp.sum(gated, axis=1) / cnt
        alive = (jnp.sum(new_m, axis=1) > 0.0).astype(x.dtype)
        r_total = r_total + jnp.concatenate([gmax, gmean], axis=-1) * alive
        feats, m = gated, new_m

    h = jax.nn.relu(r_total @ params["lin1_w"] + params["lin1_b"])
    h = jax.nn.relu(h @ params["lin2_w"] + params["lin2_b"])
    logits = h @ params["lin3_w"] + params["lin3_b"]
    return jax.nn.log_softmax(logits, axis=-1)


# ----------------------------------------------------------------------------
# Main
# ----------------------------------------------------------------------------
if __name__ == "__main__":
    B, N = 2, 16              # graphs, max nodes per graph
    F_IN, H, C = 8, 32, 4     # num_features, nhid, num_classes
    RATIO = 0.5               # pooling_ratio

    key = jax.random.PRNGKey(0)
    keys = jax.random.split(key, 16)

    def w(k, shape, scale=0.1):
        return (scale * jax.random.normal(k, shape)).astype(jnp.float32)

    params = {
        "conv1_w": w(keys[0], (F_IN, H)), "conv1_b": w(keys[1], (1, H)),
        "pool1_w": w(keys[2], (H, 1)),    "pool1_b": w(keys[3], (1, 1)),
        "conv2_w": w(keys[4], (H, H)),    "conv2_b": w(keys[5], (1, H)),
        "pool2_w": w(keys[6], (H, 1)),    "pool2_b": w(keys[7], (1, 1)),
        "conv3_w": w(keys[8], (H, H)),    "conv3_b": w(keys[9], (1, H)),
        "pool3_w": w(keys[10], (H, 1)),   "pool3_b": w(keys[11], (1, 1)),
        "lin1_w": w(keys[12], (2 * H, H)),  "lin1_b": jnp.zeros((1, H), jnp.float32),
        "lin2_w": w(keys[13], (H, H // 2)), "lin2_b": jnp.zeros((1, H // 2), jnp.float32),
        "lin3_w": w(keys[14], (H // 2, C)), "lin3_b": jnp.zeros((1, C), jnp.float32),
    }

    # node features
    x = jax.random.normal(keys[15], (B, N, F_IN)).astype(jnp.float32)

    # deterministic ring graph per batch element (undirected, no self loops)
    idx = jnp.arange(N)
    a = jnp.zeros((N, N), jnp.float32).at[idx, (idx + 1) % N].set(1.0)
    a = jnp.clip(a + a.T, 0.0, 1.0)
    a0 = jnp.broadcast_to(a, (B, N, N)).astype(jnp.float32)

    mask0 = jnp.ones((B, N, 1), jnp.float32)

    out = forward(params, x, a0, mask0, RATIO)
    out = jax.block_until_ready(out)
    assert out.shape == (B, C)
    assert bool(jnp.all(jnp.isfinite(out)))

    ref = forward_reference(params, x, a0, mask0, RATIO)
    max_err = float(jnp.max(jnp.abs(out - ref)))
    assert max_err < 2e-2, f"mismatch vs reference: {max_err}"

    print("KERNEL_OK")
</pallas_src>

<mosaic_0001>
module attributes {stable_mosaic.version = 11 : i64} {
  func.func @sagpool_net_kernel(%arg0: i32, %arg1: memref<1x16x16xbf16, #tpu.memory_space<vmem>>, %arg2: memref<1x16x1xf32, #tpu.memory_space<vmem>>, %arg3: memref<1x16x8xf32, #tpu.memory_space<vmem>>, %arg4: memref<8x32xf32, #tpu.memory_space<vmem>>, %arg5: memref<1x32xf32, #tpu.memory_space<vmem>>, %arg6: memref<32x1xf32, #tpu.memory_space<vmem>>, %arg7: memref<1x1xf32, #tpu.memory_space<vmem>>, %arg8: memref<32x32xf32, #tpu.memory_space<vmem>>, %arg9: memref<1x32xf32, #tpu.memory_space<vmem>>, %arg10: memref<32x1xf32, #tpu.memory_space<vmem>>, %arg11: memref<1x1xf32, #tpu.memory_space<vmem>>, %arg12: memref<32x32xf32, #tpu.memory_space<vmem>>, %arg13: memref<1x32xf32, #tpu.memory_space<vmem>>, %arg14: memref<32x1xf32, #tpu.memory_space<vmem>>, %arg15: memref<1x1xf32, #tpu.memory_space<vmem>>, %arg16: memref<64x32xf32, #tpu.memory_space<vmem>>, %arg17: memref<1x32xf32, #tpu.memory_space<vmem>>, %arg18: memref<32x16xf32, #tpu.memory_space<vmem>>, %arg19: memref<1x16xf32, #tpu.memory_space<vmem>>, %arg20: memref<16x4xf32, #tpu.memory_space<vmem>>, %arg21: memref<1x4xf32, #tpu.memory_space<vmem>>, %arg22: memref<1x1x4xf32, #tpu.memory_space<vmem>>) attributes {dimension_semantics = [#tpu.dimension_semantics<parallel>], iteration_bounds = array<i64: 2>, scalar_prefetch = 0 : i64, scratch_operands = 0 : i64, tpu.core_type = #tpu.core_type<tc>, window_params = [{transform_indices = @transform_0, window_bounds = array<i64: 1, 16, 16>}, {transform_indices = @transform_1, window_bounds = array<i64: 1, 16, 1>}, {transform_indices = @transform_2, window_bounds = array<i64: 1, 16, 8>}, {pipeline_mode = #tpu.pipeline_mode<synchronous>, transform_indices = @transform_3, window_bounds = array<i64: 8, 32>}, {pipeline_mode = #tpu.pipeline_mode<synchronous>, transform_indices = @transform_4, window_bounds = array<i64: 1, 32>}, {pipeline_mode = #tpu.pipeline_mode<synchronous>, transform_indices = @transform_5, window_bounds = array<i64: 32, 1>}, {pipeline_mode = #tpu.pipeline_mode<synchronous>, transform_indices = @transform_6, window_bounds = array<i64: 1, 1>}, {pipeline_mode = #tpu.pipeline_mode<synchronous>, transform_indices = @transform_7, window_bounds = array<i64: 32, 32>}, {pipeline_mode = #tpu.pipeline_mode<synchronous>, transform_indices = @transform_8, window_bounds = array<i64: 1, 32>}, {pipeline_mode = #tpu.pipeline_mode<synchronous>, transform_indices = @transform_9, window_bounds = array<i64: 32, 1>}, {pipeline_mode = #tpu.pipeline_mode<synchronous>, transform_indices = @transform_10, window_bounds = array<i64: 1, 1>}, {pipeline_mode = #tpu.pipeline_mode<synchronous>, transform_indices = @transform_11, window_bounds = array<i64: 32, 32>}, {pipeline_mode = #tpu.pipeline_mode<synchronous>, transform_indices = @transform_12, window_bounds = array<i64: 1, 32>}, {pipeline_mode = #tpu.pipeline_mode<synchronous>, transform_indices = @transform_13, window_bounds = array<i64: 32, 1>}, {pipeline_mode = #tpu.pipeline_mode<synchronous>, transform_indices = @transform_14, window_bounds = array<i64: 1, 1>}, {pipeline_mode = #tpu.pipeline_mode<synchronous>, transform_indices = @transform_15, window_bounds = array<i64: 64, 32>}, {pipeline_mode = #tpu.pipeline_mode<synchronous>, transform_indices = @transform_16, window_bounds = array<i64: 1, 32>}, {pipeline_mode = #tpu.pipeline_mode<synchronous>, transform_indices = @transform_17, window_bounds = array<i64: 32, 16>}, {pipeline_mode = #tpu.pipeline_mode<synchronous>, transform_indices = @transform_18, window_bounds = array<i64: 1, 16>}, {pipeline_mode = #tpu.pipeline_mode<synchronous>, transform_indices = @transform_19, window_bounds = array<i64: 16, 4>}, {pipeline_mode = #tpu.pipeline_mode<synchronous>, transform_indices = @transform_20, window_bounds = array<i64: 1, 4>}, {transform_indices = @transform_21, window_bounds = array<i64: 1, 1, 4>}]} {
    %c0 = arith.constant 0 : index
    %c0_0 = arith.constant 0 : index
    %c0_1 = arith.constant 0 : index
    %0 = vector.load %arg1[%c0, %c0_0, %c0_1] : memref<1x16x16xbf16, #tpu.memory_space<vmem>>, vector<1x16x16xbf16>
    %1 = vector.shape_cast %0 : vector<1x16x16xbf16> to vector<16x16xbf16>
    %2 = arith.extf %1 : vector<16x16xbf16> to vector<16x16xf32>
    %c0_2 = arith.constant 0 : index
    %c0_3 = arith.constant 0 : index
    %c0_4 = arith.constant 0 : index
    %3 = vector.load %arg2[%c0_2, %c0_3, %c0_4] : memref<1x16x1xf32, #tpu.memory_space<vmem>>, vector<1x16x1xf32>
    %4 = vector.shape_cast %3 : vector<1x16x1xf32> to vector<16x1xf32>
    %c0_5 = arith.constant 0 : index
    %c0_6 = arith.constant 0 : index
    %c0_7 = arith.constant 0 : index
    %5 = vector.load %arg3[%c0_5, %c0_6, %c0_7] : memref<1x16x8xf32, #tpu.memory_space<vmem>>, vector<1x16x8xf32>
    %6 = vector.shape_cast %5 : vector<1x16x8xf32> to vector<16x8xf32>
    %7 = tpu.iota {dimensions = array<i32: 0>} : vector<16x16xi32>
    %8 = tpu.iota {dimensions = array<i32: 1>} : vector<16x16xi32>
    %9 = arith.cmpi eq, %7, %8 : vector<16x16xi32>
    %10 = arith.extui %9 : vector<16x16xi1> to vector<16x16xi32>
    %11 = arith.sitofp %10 : vector<16x16xi32> to vector<16x16xf32>
    %12 = tpu.transpose %4, [1, 0] : vector<16x1xf32> -> vector<1x16xf32>
    %13 = vector.broadcast %4 : vector<16x1xf32> to vector<16x16xf32>
    %14 = arith.mulf %2, %13 : vector<16x16xf32>
    %15 = vector.broadcast %12 : vector<1x16xf32> to vector<16x16xf32>
    %16 = arith.mulf %14, %15 : vector<16x16xf32>
    %17 = vector.broadcast %4 : vector<16x1xf32> to vector<16x16xf32>
    %18 = arith.mulf %11, %17 : vector<16x16xf32>
    %19 = arith.addf %16, %18 : vector<16x16xf32>
    %cst = arith.constant dense<0.000000e+00> : vector<16xf32>
    %20 = vector.multi_reduction <add>, %19, %cst [1] : vector<16x16xf32> to vector<16xf32>
    %21 = vector.shape_cast %20 : vector<16xf32> to vector<16x1xf32>
    %cst_8 = arith.constant 0.000000e+00 : f32
    %22 = vector.broadcast %cst_8 : f32 to vector<16x1xf32>
    %23 = arith.cmpf ogt, %21, %22 : vector<16x1xf32>
    %cst_9 = arith.constant 9.99999996E-13 : f32
    %24 = vector.broadcast %cst_9 : f32 to vector<16x1xf32>
    %25 = arith.maximumf %21, %24 : vector<16x1xf32>
    %26 = math.rsqrt %25 : vector<16x1xf32>
    %cst_10 = arith.constant 0.000000e+00 : f32
    %27 = vector.broadcast %cst_10 : f32 to vector<16x1xf32>
    %28 = arith.select %23, %26, %27 : vector<16x1xi1>, vector<16x1xf32>
    %29 = vector.broadcast %28 : vector<16x1xf32> to vector<16x16xf32>
    %30 = arith.mulf %19, %29 : vector<16x16xf32>
    %31 = tpu.transpose %28, [1, 0] : vector<16x1xf32> -> vector<1x16xf32>
    %32 = vector.broadcast %31 : vector<1x16xf32> to vector<16x16xf32>
    %33 = arith.mulf %30, %32 : vector<16x16xf32>
    %c0_11 = arith.constant 0 : index
    %c0_12 = arith.constant 0 : index
    %34 = vector.load %arg4[%c0_11, %c0_12] : memref<8x32xf32, #tpu.memory_space<vmem>>, vector<8x32xf32>
    %cst_13 = arith.constant dense<0.000000e+00> : vector<16x32xf32>
    %35 = tpu.matmul %6, %34, %cst_13 {dimension_numbers = #tpu.dot_dimension_numbers<[1], [0], [0], [1], [0, 0, 1, 1], [], []>} : vector<16x8xf32>, vector<8x32xf32>, vector<16x32xf32> -> vector<16x32xf32>
    %cst_14 = arith.constant dense<0.000000e+00> : vector<16x32xf32>
    %36 = tpu.matmul %33, %35, %cst_14 {dimension_numbers = #tpu.dot_dimension_numbers<[1], [0], [0], [1], [0, 0, 1, 1], [], []>} : vector<16x16xf32>, vector<16x32xf32>, vector<16x32xf32> -> vector<16x32xf32>
    %c0_15 = arith.constant 0 : index
    %c0_16 = arith.constant 0 : index
    %37 = vector.load %arg5[%c0_15, %c0_16] : memref<1x32xf32, #tpu.memory_space<vmem>>, vector<1x32xf32>
    %38 = vector.broadcast %37 : vector<1x32xf32> to vector<16x32xf32>
    %39 = arith.addf %36, %38 : vector<16x32xf32>
    %cst_17 = arith.constant 0.000000e+00 : f32
    %40 = vector.broadcast %cst_17 : f32 to vector<16x32xf32>
    %41 = arith.maximumf %39, %40 : vector<16x32xf32>
    %42 = vector.broadcast %4 : vector<16x1xf32> to vector<16x32xf32>
    %43 = arith.mulf %41, %42 : vector<16x32xf32>
    %c0_18 = arith.constant 0 : index
    %c0_19 = arith.constant 0 : index
    %44 = vector.load %arg6[%c0_18, %c0_19] : memref<32x1xf32, #tpu.memory_space<vmem>>, vector<32x1xf32>
    %cst_20 = arith.constant dense<0.000000e+00> : vector<16x1xf32>
    %45 = tpu.matmul %43, %44, %cst_20 {dimension_numbers = #tpu.dot_dimension_numbers<[1], [0], [0], [1], [0, 0, 1, 1], [], []>} : vector<16x32xf32>, vector<32x1xf32>, vector<16x1xf32> -> vector<16x1xf32>
    %cst_21 = arith.constant dense<0.000000e+00> : vector<16x1xf32>
    %46 = tpu.matmul %33, %45, %cst_21 {dimension_numbers = #tpu.dot_dimension_numbers<[1], [0], [0], [1], [0, 0, 1, 1], [], []>} : vector<16x16xf32>, vector<16x1xf32>, vector<16x1xf32> -> vector<16x1xf32>
    %c0_22 = arith.constant 0 : index
    %c0_23 = arith.constant 0 : index
    %47 = vector.load %arg7[%c0_22, %c0_23] : memref<1x1xf32, #tpu.memory_space<vmem>>, vector<1x1xf32>
    %48 = vector.broadcast %47 : vector<1x1xf32> to vector<16x1xf32>
    %49 = arith.addf %46, %48 : vector<16x1xf32>
    %50 = tpu.transpose %49, [1, 0] : vector<16x1xf32> -> vector<1x16xf32>
    %51 = vector.broadcast %50 : vector<1x16xf32> to vector<16x16xf32>
    %52 = vector.broadcast %49 : vector<16x1xf32> to vector<16x16xf32>
    %53 = arith.cmpf ogt, %51, %52 : vector<16x16xf32>
    %54 = vector.broadcast %50 : vector<1x16xf32> to vector<16x16xf32>
    %55 = vector.broadcast %49 : vector<16x1xf32> to vector<16x16xf32>
    %56 = arith.cmpf oeq, %54, %55 : vector<16x16xf32>
    %57 = arith.cmpi slt, %8, %7 : vector<16x16xi32>
    %58 = arith.andi %56, %57 : vector<16x16xi1>
    %59 = arith.ori %53, %58 : vector<16x16xi1>
    %60 = arith.extui %59 : vector<16x16xi1> to vector<16x16xi32>
    %61 = arith.sitofp %60 : vector<16x16xi32> to vector<16x16xf32>
    %62 = vector.broadcast %12 : vector<1x16xf32> to vector<16x16xf32>
    %63 = arith.mulf %61, %62 : vector<16x16xf32>
    %cst_24 = arith.constant dense<0.000000e+00> : vector<16xf32>
    %64 = vector.multi_reduction <add>, %63, %cst_24 [1] : vector<16x16xf32> to vector<16xf32>
    %65 = vector.shape_cast %64 : vector<16xf32> to vector<16x1xf32>
    %cst_25 = arith.constant dense<0.000000e+00> : vector<1xf32>
    %66 = vector.multi_reduction <add>, %4, %cst_25 [0] : vector<16x1xf32> to vector<1xf32>
    %67 = vector.shape_cast %66 : vector<1xf32> to vector<1x1xf32>
    %cst_26 = arith.constant 5.000000e-01 : f32
    %68 = vector.broadcast %cst_26 : f32 to vector<1x1xf32>
    %69 = arith.mulf %68, %67 : vector<1x1xf32>
    %70 = math.ceil %69 : vector<1x1xf32>
    %71 = vector.broadcast %70 : vector<1x1xf32> to vector<16x1xf32>
    %72 = arith.cmpf olt, %65, %71 : vector<16x1xf32>
    %cst_27 = arith.constant 0.000000e+00 : f32
    %73 = vector.broadcast %cst_27 : f32 to vector<16x1xf32>
    %74 = arith.cmpf ogt, %4, %73 : vector<16x1xf32>
    %75 = arith.andi %72, %74 : vector<16x1xi1>
    %cst_28 = arith.constant 1.000000e+00 : f32
    %cst_29 = arith.constant 0.000000e+00 : f32
    %76 = vector.broadcast %cst_28 : f32 to vector<16x1xf32>
    %77 = vector.broadcast %cst_29 : f32 to vector<16x1xf32>
    %78 = arith.select %75, %76, %77 : vector<16x1xi1>, vector<16x1xf32>
    %79 = math.tanh %49 : vector<16x1xf32>
    %80 = vector.broadcast %79 : vector<16x1xf32> to vector<16x32xf32>
    %81 = arith.mulf %43, %80 : vector<16x32xf32>
    %82 = vector.broadcast %78 : vector<16x1xf32> to vector<16x32xf32>
    %83 = arith.mulf %81, %82 : vector<16x32xf32>
    %cst_30 = arith.constant 0.000000e+00 : f32
    %84 = vector.broadcast %cst_30 : f32 to vector<16x1xf32>
    %85 = arith.cmpf ogt, %78, %84 : vector<16x1xf32>
    %cst_31 = arith.constant -1.000000e+30 : f32
    %86 = vector.shape_cast %85 : vector<16x1xi1> to vector<16x1xi1>
    %87 = vector.broadcast %86 : vector<16x1xi1> to vector<16x32xi1>
    %88 = vector.broadcast %cst_31 : f32 to vector<16x32xf32>
    %89 = arith.select %87, %83, %88 : vector<16x32xi1>, vector<16x32xf32>
    %cst_32 = arith.constant dense<0xFF800000> : vector<32xf32>
    %90 = vector.multi_reduction <maximumf>, %89, %cst_32 [0] : vector<16x32xf32> to vector<32xf32>
    %91 = vector.shape_cast %90 : vector<32xf32> to vector<1x32xf32>
    %cst_33 = arith.constant dense<0.000000e+00> : vector<1xf32>
    %92 = vector.multi_reduction <add>, %78, %cst_33 [0] : vector<16x1xf32> to vector<1xf32>
    %93 = vector.shape_cast %92 : vector<1xf32> to vector<1x1xf32>
    %cst_34 = arith.constant 1.000000e+00 : f32
    %94 = vector.broadcast %cst_34 : f32 to vector<1x1xf32>
    %95 = arith.maximumf %93, %94 : vector<1x1xf32>
    %96 = tpu.reciprocal %95 {approx = true} : vector<1x1xf32> -> vector<1x1xf32>
    %cst_35 = arith.constant dense<0.000000e+00> : vector<32xf32>
    %97 = vector.multi_reduction <add>, %83, %cst_35 [0] : vector<16x32xf32> to vector<32xf32>
    %98 = vector.shape_cast %97 : vector<32xf32> to vector<1x32xf32>
    %99 = vector.broadcast %96 : vector<1x1xf32> to vector<1x32xf32>
    %100 = arith.mulf %98, %99 : vector<1x32xf32>
    %cst_36 = arith.constant 0.000000e+00 : f32
    %101 = vector.broadcast %cst_36 : f32 to vector<1x1xf32>
    %102 = arith.cmpf ogt, %93, %101 : vector<1x1xf32>
    %cst_37 = arith.constant 1.000000e+00 : f32
    %cst_38 = arith.constant 0.000000e+00 : f32
    %103 = vector.broadcast %cst_37 : f32 to vector<1x1xf32>
    %104 = vector.broadcast %cst_38 : f32 to vector<1x1xf32>
    %105 = arith.select %102, %103, %104 : vector<1x1xi1>, vector<1x1xf32>
    %106 = vector.broadcast %105 : vector<1x1xf32> to vector<1x32xf32>
    %107 = arith.mulf %91, %106 : vector<1x32xf32>
    %108 = vector.broadcast %105 : vector<1x1xf32> to vector<1x32xf32>
    %109 = arith.mulf %100, %108 : vector<1x32xf32>
    %110 = tpu.transpose %78, [1, 0] : vector<16x1xf32> -> vector<1x16xf32>
    %111 = vector.broadcast %78 : vector<16x1xf32> to vector<16x16xf32>
    %112 = arith.mulf %2, %111 : vector<16x16xf32>
    %113 = vector.broadcast %110 : vector<1x16xf32> to vector<16x16xf32>
    %114 = arith.mulf %112, %113 : vector<16x16xf32>
    %115 = vector.broadcast %78 : vector<16x1xf32> to vector<16x16xf32>
    %116 = arith.mulf %11, %115 : vector<16x16xf32>
    %117 = arith.addf %114, %116 : vector<16x16xf32>
    %cst_39 = arith.constant dense<0.000000e+00> : vector<16xf32>
    %118 = vector.multi_reduction <add>, %117, %cst_39 [1] : vector<16x16xf32> to vector<16xf32>
    %119 = vector.shape_cast %118 : vector<16xf32> to vector<16x1xf32>
    %cst_40 = arith.constant 0.000000e+00 : f32
    %120 = vector.broadcast %cst_40 : f32 to vector<16x1xf32>
    %121 = arith.cmpf ogt, %119, %120 : vector<16x1xf32>
    %cst_41 = arith.constant 9.99999996E-13 : f32
    %122 = vector.broadcast %cst_41 : f32 to vector<16x1xf32>
    %123 = arith.maximumf %119, %122 : vector<16x1xf32>
    %124 = math.rsqrt %123 : vector<16x1xf32>
    %cst_42 = arith.constant 0.000000e+00 : f32
    %125 = vector.broadcast %cst_42 : f32 to vector<16x1xf32>
    %126 = arith.select %121, %124, %125 : vector<16x1xi1>, vector<16x1xf32>
    %127 = vector.broadcast %126 : vector<16x1xf32> to vector<16x16xf32>
    %128 = arith.mulf %117, %127 : vector<16x16xf32>
    %129 = tpu.transpose %126, [1, 0] : vector<16x1xf32> -> vector<1x16xf32>
    %130 = vector.broadcast %129 : vector<1x16xf32> to vector<16x16xf32>
    %131 = arith.mulf %128, %130 : vector<16x16xf32>
    %c0_43 = arith.constant 0 : index
    %c0_44 = arith.constant 0 : index
    %132 = vector.load %arg8[%c0_43, %c0_44] : memref<32x32xf32, #tpu.memory_space<vmem>>, vector<32x32xf32>
    %cst_45 = arith.constant dense<0.000000e+00> : vector<16x32xf32>
    %133 = tpu.matmul %83, %132, %cst_45 {dimension_numbers = #tpu.dot_dimension_numbers<[1], [0], [0], [1], [0, 0, 1, 1], [], []>} : vector<16x32xf32>, vector<32x32xf32>, vector<16x32xf32> -> vector<16x32xf32>
    %cst_46 = arith.constant dense<0.000000e+00> : vector<16x32xf32>
    %134 = tpu.matmul %131, %133, %cst_46 {dimension_numbers = #tpu.dot_dimension_numbers<[1], [0], [0], [1], [0, 0, 1, 1], [], []>} : vector<16x16xf32>, vector<16x32xf32>, vector<16x32xf32> -> vector<16x32xf32>
    %c0_47 = arith.constant 0 : index
    %c0_48 = arith.constant 0 : index
    %135 = vector.load %arg9[%c0_47, %c0_48] : memref<1x32xf32, #tpu.memory_space<vmem>>, vector<1x32xf32>
    %136 = vector.broadcast %135 : vector<1x32xf32> to vector<16x32xf32>
    %137 = arith.addf %134, %136 : vector<16x32xf32>
    %cst_49 = arith.constant 0.000000e+00 : f32
    %138 = vector.broadcast %cst_49 : f32 to vector<16x32xf32>
    %139 = arith.maximumf %137, %138 : vector<16x32xf32>
    %140 = vector.broadcast %78 : vector<16x1xf32> to vector<16x32xf32>
    %141 = arith.mulf %139, %140 : vector<16x32xf32>
    %c0_50 = arith.constant 0 : index
    %c0_51 = arith.constant 0 : index
    %142 = vector.load %arg10[%c0_50, %c0_51] : memref<32x1xf32, #tpu.memory_space<vmem>>, vector<32x1xf32>
    %cst_52 = arith.constant dense<0.000000e+00> : vector<16x1xf32>
    %143 = tpu.matmul %141, %142, %cst_52 {dimension_numbers = #tpu.dot_dimension_numbers<[1], [0], [0], [1], [0, 0, 1, 1], [], []>} : vector<16x32xf32>, vector<32x1xf32>, vector<16x1xf32> -> vector<16x1xf32>
    %cst_53 = arith.constant dense<0.000000e+00> : vector<16x1xf32>
    %144 = tpu.matmul %131, %143, %cst_53 {dimension_numbers = #tpu.dot_dimension_numbers<[1], [0], [0], [1], [0, 0, 1, 1], [], []>} : vector<16x16xf32>, vector<16x1xf32>, vector<16x1xf32> -> vector<16x1xf32>
    %c0_54 = arith.constant 0 : index
    %c0_55 = arith.constant 0 : index
    %145 = vector.load %arg11[%c0_54, %c0_55] : memref<1x1xf32, #tpu.memory_space<vmem>>, vector<1x1xf32>
    %146 = vector.broadcast %145 : vector<1x1xf32> to vector<16x1xf32>
    %147 = arith.addf %144, %146 : vector<16x1xf32>
    %148 = tpu.transpose %147, [1, 0] : vector<16x1xf32> -> vector<1x16xf32>
    %149 = vector.broadcast %148 : vector<1x16xf32> to vector<16x16xf32>
    %150 = vector.broadcast %147 : vector<16x1xf32> to vector<16x16xf32>
    %151 = arith.cmpf ogt, %149, %150 : vector<16x16xf32>
    %152 = vector.broadcast %148 : vector<1x16xf32> to vector<16x16xf32>
    %153 = vector.broadcast %147 : vector<16x1xf32> to vector<16x16xf32>
    %154 = arith.cmpf oeq, %152, %153 : vector<16x16xf32>
    %155 = arith.cmpi slt, %8, %7 : vector<16x16xi32>
    %156 = arith.andi %154, %155 : vector<16x16xi1>
    %157 = arith.ori %151, %156 : vector<16x16xi1>
    %158 = arith.extui %157 : vector<16x16xi1> to vector<16x16xi32>
    %159 = arith.sitofp %158 : vector<16x16xi32> to vector<16x16xf32>
    %160 = vector.broadcast %110 : vector<1x16xf32> to vector<16x16xf32>
    %161 = arith.mulf %159, %160 : vector<16x16xf32>
    %cst_56 = arith.constant dense<0.000000e+00> : vector<16xf32>
    %162 = vector.multi_reduction <add>, %161, %cst_56 [1] : vector<16x16xf32> to vector<16xf32>
    %163 = vector.shape_cast %162 : vector<16xf32> to vector<16x1xf32>
    %cst_57 = arith.constant dense<0.000000e+00> : vector<1xf32>
    %164 = vector.multi_reduction <add>, %78, %cst_57 [0] : vector<16x1xf32> to vector<1xf32>
    %165 = vector.shape_cast %164 : vector<1xf32> to vector<1x1xf32>
    %cst_58 = arith.constant 5.000000e-01 : f32
    %166 = vector.broadcast %cst_58 : f32 to vector<1x1xf32>
    %167 = arith.mulf %166, %165 : vector<1x1xf32>
    %168 = math.ceil %167 : vector<1x1xf32>
    %169 = vector.broadcast %168 : vector<1x1xf32> to vector<16x1xf32>
    %170 = arith.cmpf olt, %163, %169 : vector<16x1xf32>
    %cst_59 = arith.constant 0.000000e+00 : f32
    %171 = vector.broadcast %cst_59 : f32 to vector<16x1xf32>
    %172 = arith.cmpf ogt, %78, %171 : vector<16x1xf32>
    %173 = arith.andi %170, %172 : vector<16x1xi1>
    %cst_60 = arith.constant 1.000000e+00 : f32
    %cst_61 = arith.constant 0.000000e+00 : f32
    %174 = vector.broadcast %cst_60 : f32 to vector<16x1xf32>
    %175 = vector.broadcast %cst_61 : f32 to vector<16x1xf32>
    %176 = arith.select %173, %174, %175 : vector<16x1xi1>, vector<16x1xf32>
    %177 = math.tanh %147 : vector<16x1xf32>
    %178 = vector.broadcast %177 : vector<16x1xf32> to vector<16x32xf32>
    %179 = arith.mulf %141, %178 : vector<16x32xf32>
    %180 = vector.broadcast %176 : vector<16x1xf32> to vector<16x32xf32>
    %181 = arith.mulf %179, %180 : vector<16x32xf32>
    %cst_62 = arith.constant 0.000000e+00 : f32
    %182 = vector.broadcast %cst_62 : f32 to vector<16x1xf32>
    %183 = arith.cmpf ogt, %176, %182 : vector<16x1xf32>
    %cst_63 = arith.constant -1.000000e+30 : f32
    %184 = vector.shape_cast %183 : vector<16x1xi1> to vector<16x1xi1>
    %185 = vector.broadcast %184 : vector<16x1xi1> to vector<16x32xi1>
    %186 = vector.broadcast %cst_63 : f32 to vector<16x32xf32>
    %187 = arith.select %185, %181, %186 : vector<16x32xi1>, vector<16x32xf32>
    %cst_64 = arith.constant dense<0xFF800000> : vector<32xf32>
    %188 = vector.multi_reduction <maximumf>, %187, %cst_64 [0] : vector<16x32xf32> to vector<32xf32>
    %189 = vector.shape_cast %188 : vector<32xf32> to vector<1x32xf32>
    %cst_65 = arith.constant dense<0.000000e+00> : vector<1xf32>
    %190 = vector.multi_reduction <add>, %176, %cst_65 [0] : vector<16x1xf32> to vector<1xf32>
    %191 = vector.shape_cast %190 : vector<1xf32> to vector<1x1xf32>
    %cst_66 = arith.constant 1.000000e+00 : f32
    %192 = vector.broadcast %cst_66 : f32 to vector<1x1xf32>
    %193 = arith.maximumf %191, %192 : vector<1x1xf32>
    %194 = tpu.reciprocal %193 {approx = true} : vector<1x1xf32> -> vector<1x1xf32>
    %cst_67 = arith.constant dense<0.000000e+00> : vector<32xf32>
    %195 = vector.multi_reduction <add>, %181, %cst_67 [0] : vector<16x32xf32> to vector<32xf32>
    %196 = vector.shape_cast %195 : vector<32xf32> to vector<1x32xf32>
    %197 = vector.broadcast %194 : vector<1x1xf32> to vector<1x32xf32>
    %198 = arith.mulf %196, %197 : vector<1x32xf32>
    %cst_68 = arith.constant 0.000000e+00 : f32
    %199 = vector.broadcast %cst_68 : f32 to vector<1x1xf32>
    %200 = arith.cmpf ogt, %191, %199 : vector<1x1xf32>
    %cst_69 = arith.constant 1.000000e+00 : f32
    %cst_70 = arith.constant 0.000000e+00 : f32
    %201 = vector.broadcast %cst_69 : f32 to vector<1x1xf32>
    %202 = vector.broadcast %cst_70 : f32 to vector<1x1xf32>
    %203 = arith.select %200, %201, %202 : vector<1x1xi1>, vector<1x1xf32>
    %204 = vector.broadcast %203 : vector<1x1xf32> to vector<1x32xf32>
    %205 = arith.mulf %189, %204 : vector<1x32xf32>
    %206 = vector.broadcast %203 : vector<1x1xf32> to vector<1x32xf32>
    %207 = arith.mulf %198, %206 : vector<1x32xf32>
    %208 = tpu.transpose %176, [1, 0] : vector<16x1xf32> -> vector<1x16xf32>
    %209 = vector.broadcast %176 : vector<16x1xf32> to vector<16x16xf32>
    %210 = arith.mulf %2, %209 : vector<16x16xf32>
    %211 = vector.broadcast %208 : vector<1x16xf32> to vector<16x16xf32>
    %212 = arith.mulf %210, %211 : vector<16x16xf32>
    %213 = vector.broadcast %176 : vector<16x1xf32> to vector<16x16xf32>
    %214 = arith.mulf %11, %213 : vector<16x16xf32>
    %215 = arith.addf %212, %214 : vector<16x16xf32>
    %cst_71 = arith.constant dense<0.000000e+00> : vector<16xf32>
    %216 = vector.multi_reduction <add>, %215, %cst_71 [1] : vector<16x16xf32> to vector<16xf32>
    %217 = vector.shape_cast %216 : vector<16xf32> to vector<16x1xf32>
    %cst_72 = arith.constant 0.000000e+00 : f32
    %218 = vector.broadcast %cst_72 : f32 to vector<16x1xf32>
    %219 = arith.cmpf ogt, %217, %218 : vector<16x1xf32>
    %cst_73 = arith.constant 9.99999996E-13 : f32
    %220 = vector.broadcast %cst_73 : f32 to vector<16x1xf32>
    %221 = arith.maximumf %217, %220 : vector<16x1xf32>
    %222 = math.rsqrt %221 : vector<16x1xf32>
    %cst_74 = arith.constant 0.000000e+00 : f32
    %223 = vector.broadcast %cst_74 : f32 to vector<16x1xf32>
    %224 = arith.select %219, %222, %223 : vector<16x1xi1>, vector<16x1xf32>
    %225 = vector.broadcast %224 : vector<16x1xf32> to vector<16x16xf32>
    %226 = arith.mulf %215, %225 : vector<16x16xf32>
    %227 = tpu.transpose %224, [1, 0] : vector<16x1xf32> -> vector<1x16xf32>
    %228 = vector.broadcast %227 : vector<1x16xf32> to vector<16x16xf32>
    %229 = arith.mulf %226, %228 : vector<16x16xf32>
    %c0_75 = arith.constant 0 : index
    %c0_76 = arith.constant 0 : index
    %230 = vector.load %arg12[%c0_75, %c0_76] : memref<32x32xf32, #tpu.memory_space<vmem>>, vector<32x32xf32>
    %cst_77 = arith.constant dense<0.000000e+00> : vector<16x32xf32>
    %231 = tpu.matmul %181, %230, %cst_77 {dimension_numbers = #tpu.dot_dimension_numbers<[1], [0], [0], [1], [0, 0, 1, 1], [], []>} : vector<16x32xf32>, vector<32x32xf32>, vector<16x32xf32> -> vector<16x32xf32>
    %cst_78 = arith.constant dense<0.000000e+00> : vector<16x32xf32>
    %232 = tpu.matmul %229, %231, %cst_78 {dimension_numbers = #tpu.dot_dimension_numbers<[1], [0], [0], [1], [0, 0, 1, 1], [], []>} : vector<16x16xf32>, vector<16x32xf32>, vector<16x32xf32> -> vector<16x32xf32>
    %c0_79 = arith.constant 0 : index
    %c0_80 = arith.constant 0 : index
    %233 = vector.load %arg13[%c0_79, %c0_80] : memref<1x32xf32, #tpu.memory_space<vmem>>, vector<1x32xf32>
    %234 = vector.broadcast %233 : vector<1x32xf32> to vector<16x32xf32>
    %235 = arith.addf %232, %234 : vector<16x32xf32>
    %cst_81 = arith.constant 0.000000e+00 : f32
    %236 = vector.broadcast %cst_81 : f32 to vector<16x32xf32>
    %237 = arith.maximumf %235, %236 : vector<16x32xf32>
    %238 = vector.broadcast %176 : vector<16x1xf32> to vector<16x32xf32>
    %239 = arith.mulf %237, %238 : vector<16x32xf32>
    %c0_82 = arith.constant 0 : index
    %c0_83 = arith.constant 0 : index
    %240 = vector.load %arg14[%c0_82, %c0_83] : memref<32x1xf32, #tpu.memory_space<vmem>>, vector<32x1xf32>
    %cst_84 = arith.constant dense<0.000000e+00> : vector<16x1xf32>
    %241 = tpu.matmul %239, %240, %cst_84 {dimension_numbers = #tpu.dot_dimension_numbers<[1], [0], [0], [1], [0, 0, 1, 1], [], []>} : vector<16x32xf32>, vector<32x1xf32>, vector<16x1xf32> -> vector<16x1xf32>
    %cst_85 = arith.constant dense<0.000000e+00> : vector<16x1xf32>
    %242 = tpu.matmul %229, %241, %cst_85 {dimension_numbers = #tpu.dot_dimension_numbers<[1], [0], [0], [1], [0, 0, 1, 1], [], []>} : vector<16x16xf32>, vector<16x1xf32>, vector<16x1xf32> -> vector<16x1xf32>
    %c0_86 = arith.constant 0 : index
    %c0_87 = arith.constant 0 : index
    %243 = vector.load %arg15[%c0_86, %c0_87] : memref<1x1xf32, #tpu.memory_space<vmem>>, vector<1x1xf32>
    %244 = vector.broadcast %243 : vector<1x1xf32> to vector<16x1xf32>
    %245 = arith.addf %242, %244 : vector<16x1xf32>
    %246 = tpu.transpose %245, [1, 0] : vector<16x1xf32> -> vector<1x16xf32>
    %247 = vector.broadcast %246 : vector<1x16xf32> to vector<16x16xf32>
    %248 = vector.broadcast %245 : vector<16x1xf32> to vector<16x16xf32>
    %249 = arith.cmpf ogt, %247, %248 : vector<16x16xf32>
    %250 = vector.broadcast %246 : vector<1x16xf32> to vector<16x16xf32>
    %251 = vector.broadcast %245 : vector<16x1xf32> to vector<16x16xf32>
    %252 = arith.cmpf oeq, %250, %251 : vector<16x16xf32>
    %253 = arith.cmpi slt, %8, %7 : vector<16x16xi32>
    %254 = arith.andi %252, %253 : vector<16x16xi1>
    %255 = arith.ori %249, %254 : vector<16x16xi1>
    %256 = arith.extui %255 : vector<16x16xi1> to vector<16x16xi32>
    %257 = arith.sitofp %256 : vector<16x16xi32> to vector<16x16xf32>
    %258 = vector.broadcast %208 : vector<1x16xf32> to vector<16x16xf32>
    %259 = arith.mulf %257, %258 : vector<16x16xf32>
    %cst_88 = arith.constant dense<0.000000e+00> : vector<16xf32>
    %260 = vector.multi_reduction <add>, %259, %cst_88 [1] : vector<16x16xf32> to vector<16xf32>
    %261 = vector.shape_cast %260 : vector<16xf32> to vector<16x1xf32>
    %cst_89 = arith.constant dense<0.000000e+00> : vector<1xf32>
    %262 = vector.multi_reduction <add>, %176, %cst_89 [0] : vector<16x1xf32> to vector<1xf32>
    %263 = vector.shape_cast %262 : vector<1xf32> to vector<1x1xf32>
    %cst_90 = arith.constant 5.000000e-01 : f32
    %264 = vector.broadcast %cst_90 : f32 to vector<1x1xf32>
    %265 = arith.mulf %264, %263 : vector<1x1xf32>
    %266 = math.ceil %265 : vector<1x1xf32>
    %267 = vector.broadcast %266 : vector<1x1xf32> to vector<16x1xf32>
    %268 = arith.cmpf olt, %261, %267 : vector<16x1xf32>
    %cst_91 = arith.constant 0.000000e+00 : f32
    %269 = vector.broadcast %cst_91 : f32 to vector<16x1xf32>
    %270 = arith.cmpf ogt, %176, %269 : vector<16x1xf32>
    %271 = arith.andi %268, %270 : vector<16x1xi1>
    %cst_92 = arith.constant 1.000000e+00 : f32
    %cst_93 = arith.constant 0.000000e+00 : f32
    %272 = vector.broadcast %cst_92 : f32 to vector<16x1xf32>
    %273 = vector.broadcast %cst_93 : f32 to vector<16x1xf32>
    %274 = arith.select %271, %272, %273 : vector<16x1xi1>, vector<16x1xf32>
    %275 = math.tanh %245 : vector<16x1xf32>
    %276 = vector.broadcast %275 : vector<16x1xf32> to vector<16x32xf32>
    %277 = arith.mulf %239, %276 : vector<16x32xf32>
    %278 = vector.broadcast %274 : vector<16x1xf32> to vector<16x32xf32>
    %279 = arith.mulf %277, %278 : vector<16x32xf32>
    %cst_94 = arith.constant 0.000000e+00 : f32
    %280 = vector.broadcast %cst_94 : f32 to vector<16x1xf32>
    %281 = arith.cmpf ogt, %274, %280 : vector<16x1xf32>
    %cst_95 = arith.constant -1.000000e+30 : f32
    %282 = vector.shape_cast %281 : vector<16x1xi1> to vector<16x1xi1>
    %283 = vector.broadcast %282 : vector<16x1xi1> to vector<16x32xi1>
    %284 = vector.broadcast %cst_95 : f32 to vector<16x32xf32>
    %285 = arith.select %283, %279, %284 : vector<16x32xi1>, vector<16x32xf32>
    %cst_96 = arith.constant dense<0xFF800000> : vector<32xf32>
    %286 = vector.multi_reduction <maximumf>, %285, %cst_96 [0] : vector<16x32xf32> to vector<32xf32>
    %287 = vector.shape_cast %286 : vector<32xf32> to vector<1x32xf32>
    %cst_97 = arith.constant dense<0.000000e+00> : vector<1xf32>
    %288 = vector.multi_reduction <add>, %274, %cst_97 [0] : vector<16x1xf32> to vector<1xf32>
    %289 = vector.shape_cast %288 : vector<1xf32> to vector<1x1xf32>
    %cst_98 = arith.constant 1.000000e+00 : f32
    %290 = vector.broadcast %cst_98 : f32 to vector<1x1xf32>
    %291 = arith.maximumf %289, %290 : vector<1x1xf32>
    %292 = tpu.reciprocal %291 {approx = true} : vector<1x1xf32> -> vector<1x1xf32>
    %cst_99 = arith.constant dense<0.000000e+00> : vector<32xf32>
    %293 = vector.multi_reduction <add>, %279, %cst_99 [0] : vector<16x32xf32> to vector<32xf32>
    %294 = vector.shape_cast %293 : vector<32xf32> to vector<1x32xf32>
    %295 = vector.broadcast %292 : vector<1x1xf32> to vector<1x32xf32>
    %296 = arith.mulf %294, %295 : vector<1x32xf32>
    %cst_100 = arith.constant 0.000000e+00 : f32
    %297 = vector.broadcast %cst_100 : f32 to vector<1x1xf32>
    %298 = arith.cmpf ogt, %289, %297 : vector<1x1xf32>
    %cst_101 = arith.constant 1.000000e+00 : f32
    %cst_102 = arith.constant 0.000000e+00 : f32
    %299 = vector.broadcast %cst_101 : f32 to vector<1x1xf32>
    %300 = vector.broadcast %cst_102 : f32 to vector<1x1xf32>
    %301 = arith.select %298, %299, %300 : vector<1x1xi1>, vector<1x1xf32>
    %302 = vector.broadcast %301 : vector<1x1xf32> to vector<1x32xf32>
    %303 = arith.mulf %287, %302 : vector<1x32xf32>
    %304 = vector.broadcast %301 : vector<1x1xf32> to vector<1x32xf32>
    %305 = arith.mulf %296, %304 : vector<1x32xf32>
    %306 = arith.addf %107, %205 : vector<1x32xf32>
    %307 = arith.addf %306, %303 : vector<1x32xf32>
    %308 = arith.addf %109, %207 : vector<1x32xf32>
    %309 = arith.addf %308, %305 : vector<1x32xf32>
    %c0_103 = arith.constant 0 : index
    %c0_104 = arith.constant 0 : index
    %310 = vector.load %arg16[%c0_103, %c0_104] : memref<64x32xf32, #tpu.memory_space<vmem>>, vector<32x32xf32>
    %cst_105 = arith.constant dense<0.000000e+00> : vector<1x32xf32>
    %311 = tpu.matmul %307, %310, %cst_105 {dimension_numbers = #tpu.dot_dimension_numbers<[1], [0], [0], [1], [0, 0, 1, 1], [], []>} : vector<1x32xf32>, vector<32x32xf32>, vector<1x32xf32> -> vector<1x32xf32>
    %c32 = arith.constant 32 : index
    %c0_106 = arith.constant 0 : index
    %312 = vector.load %arg16[%c32, %c0_106] : memref<64x32xf32, #tpu.memory_space<vmem>>, vector<32x32xf32>
    %cst_107 = arith.constant dense<0.000000e+00> : vector<1x32xf32>
    %313 = tpu.matmul %309, %312, %cst_107 {dimension_numbers = #tpu.dot_dimension_numbers<[1], [0], [0], [1], [0, 0, 1, 1], [], []>} : vector<1x32xf32>, vector<32x32xf32>, vector<1x32xf32> -> vector<1x32xf32>
    %314 = arith.addf %311, %313 : vector<1x32xf32>
    %c0_108 = arith.constant 0 : index
    %c0_109 = arith.constant 0 : index
    %315 = vector.load %arg17[%c0_108, %c0_109] : memref<1x32xf32, #tpu.memory_space<vmem>>, vector<1x32xf32>
    %316 = arith.addf %314, %315 : vector<1x32xf32>
    %cst_110 = arith.constant 0.000000e+00 : f32
    %317 = vector.broadcast %cst_110 : f32 to vector<1x32xf32>
    %318 = arith.maximumf %316, %317 : vector<1x32xf32>
    %c0_111 = arith.constant 0 : index
    %c0_112 = arith.constant 0 : index
    %319 = vector.load %arg18[%c0_111, %c0_112] : memref<32x16xf32, #tpu.memory_space<vmem>>, vector<32x16xf32>
    %cst_113 = arith.constant dense<0.000000e+00> : vector<1x16xf32>
    %320 = tpu.matmul %318, %319, %cst_113 {dimension_numbers = #tpu.dot_dimension_numbers<[1], [0], [0], [1], [0, 0, 1, 1], [], []>} : vector<1x32xf32>, vector<32x16xf32>, vector<1x16xf32> -> vector<1x16xf32>
    %c0_114 = arith.constant 0 : index
    %c0_115 = arith.constant 0 : index
    %321 = vector.load %arg19[%c0_114, %c0_115] : memref<1x16xf32, #tpu.memory_space<vmem>>, vector<1x16xf32>
    %322 = arith.addf %320, %321 : vector<1x16xf32>
    %cst_116 = arith.constant 0.000000e+00 : f32
    %323 = vector.broadcast %cst_116 : f32 to vector<1x16xf32>
    %324 = arith.maximumf %322, %323 : vector<1x16xf32>
    %c0_117 = arith.constant 0 : index
    %c0_118 = arith.constant 0 : index
    %325 = vector.load %arg20[%c0_117, %c0_118] : memref<16x4xf32, #tpu.memory_space<vmem>>, vector<16x4xf32>
    %cst_119 = arith.constant dense<0.000000e+00> : vector<1x4xf32>
    %326 = tpu.matmul %324, %325, %cst_119 {dimension_numbers = #tpu.dot_dimension_numbers<[1], [0], [0], [1], [0, 0, 1, 1], [], []>} : vector<1x16xf32>, vector<16x4xf32>, vector<1x4xf32> -> vector<1x4xf32>
    %c0_120 = arith.constant 0 : index
    %c0_121 = arith.constant 0 : index
    %327 = vector.load %arg21[%c0_120, %c0_121] : memref<1x4xf32, #tpu.memory_space<vmem>>, vector<1x4xf32>
    %328 = arith.addf %326, %327 : vector<1x4xf32>
    %cst_122 = arith.constant dense<0xFF800000> : vector<1xf32>
    %329 = vector.multi_reduction <maximumf>, %328, %cst_122 [1] : vector<1x4xf32> to vector<1xf32>
    %330 = vector.shape_cast %329 : vector<1xf32> to vector<1x1xf32>
    %331 = vector.broadcast %330 : vector<1x1xf32> to vector<1x4xf32>
    %332 = arith.subf %328, %331 : vector<1x4xf32>
    %333 = math.exp %332 : vector<1x4xf32>
    %cst_123 = arith.constant dense<0.000000e+00> : vector<1xf32>
    %334 = vector.multi_reduction <add>, %333, %cst_123 [1] : vector<1x4xf32> to vector<1xf32>
    %335 = vector.shape_cast %334 : vector<1xf32> to vector<1x1xf32>
    %336 = math.log %335 : vector<1x1xf32>
    %337 = vector.broadcast %336 : vector<1x1xf32> to vector<1x4xf32>
    %338 = arith.subf %332, %337 : vector<1x4xf32>
    %c0_124 = arith.constant 0 : index
    %c0_125 = arith.constant 0 : index
    %c0_126 = arith.constant 0 : index
    %339 = vector.load %arg22[%c0_124, %c0_125, %c0_126] : memref<1x1x4xf32, #tpu.memory_space<vmem>>, vector<1x1x4xf32>
    %340 = vector.shape_cast %339 : vector<1x1x4xf32> to vector<1x4xf32>
    %341 = vector.shape_cast %338 : vector<1x4xf32> to vector<1x1x4xf32>
    tpu.vector_store %arg22[%c0_124, %c0_125, %c0_126], %341 {strides = array<i32>} : memref<1x1x4xf32, #tpu.memory_space<vmem>>, vector<1x1x4xf32>,
    return
  }
  func.func @transform_0(%arg0: i32) -> (i32, i32, i32) {
    %c0_i32 = arith.constant 0 : i32
    %c0_i32_0 = arith.constant 0 : i32
    %c0_i32_1 = arith.constant 0 : i32
    return %arg0, %c0_i32, %c0_i32_0 : i32, i32, i32
  }
  func.func @transform_1(%arg0: i32) -> (i32, i32, i32) {
    %c0_i32 = arith.constant 0 : i32
    %c0_i32_0 = arith.constant 0 : i32
    %c0_i32_1 = arith.constant 0 : i32
    return %arg0, %c0_i32, %c0_i32_0 : i32, i32, i32
  }
  func.func @transform_2(%arg0: i32) -> (i32, i32, i32) {
    %c0_i32 = arith.constant 0 : i32
    %c0_i32_0 = arith.constant 0 : i32
    %c0_i32_1 = arith.constant 0 : i32
    return %arg0, %c0_i32, %c0_i32_0 : i32, i32, i32
  }
  func.func @transform_3(%arg0: i32) -> (i32, i32) {
    %c0_i32 = arith.constant 0 : i32
    %c0_i32_0 = arith.constant 0 : i32
    %c0_i32_1 = arith.constant 0 : i32
    return %c0_i32, %c0_i32_0 : i32, i32
  }
  func.func @transform_4(%arg0: i32) -> (i32, i32) {
    %c0_i32 = arith.constant 0 : i32
    %c0_i32_0 = arith.constant 0 : i32
    %c0_i32_1 = arith.constant 0 : i32
    return %c0_i32, %c0_i32_0 : i32, i32
  }
  func.func @transform_5(%arg0: i32) -> (i32, i32) {
    %c0_i32 = arith.constant 0 : i32
    %c0_i32_0 = arith.constant 0 : i32
    %c0_i32_1 = arith.constant 0 : i32
    return %c0_i32, %c0_i32_0 : i32, i32
  }
  func.func @transform_6(%arg0: i32) -> (i32, i32) {
    %c0_i32 = arith.constant 0 : i32
    %c0_i32_0 = arith.constant 0 : i32
    %c0_i32_1 = arith.constant 0 : i32
    return %c0_i32, %c0_i32_0 : i32, i32
  }
  func.func @transform_7(%arg0: i32) -> (i32, i32) {
    %c0_i32 = arith.constant 0 : i32
    %c0_i32_0 = arith.constant 0 : i32
    %c0_i32_1 = arith.constant 0 : i32
    return %c0_i32, %c0_i32_0 : i32, i32
  }
  func.func @transform_8(%arg0: i32) -> (i32, i32) {
    %c0_i32 = arith.constant 0 : i32
    %c0_i32_0 = arith.constant 0 : i32
    %c0_i32_1 = arith.constant 0 : i32
    return %c0_i32, %c0_i32_0 : i32, i32
  }
  func.func @transform_9(%arg0: i32) -> (i32, i32) {
    %c0_i32 = arith.constant 0 : i32
    %c0_i32_0 = arith.constant 0 : i32
    %c0_i32_1 = arith.constant 0 : i32
    return %c0_i32, %c0_i32_0 : i32, i32
  }
  func.func @transform_10(%arg0: i32) -> (i32, i32) {
    %c0_i32 = arith.constant 0 : i32
    %c0_i32_0 = arith.constant 0 : i32
    %c0_i32_1 = arith.constant 0 : i32
    return %c0_i32, %c0_i32_0 : i32, i32
  }
  func.func @transform_11(%arg0: i32) -> (i32, i32) {
    %c0_i32 = arith.constant 0 : i32
    %c0_i32_0 = arith.constant 0 : i32
    %c0_i32_1 = arith.constant 0 : i32
    return %c0_i32, %c0_i32_0 : i32, i32
  }
  func.func @transform_12(%arg0: i32) -> (i32, i32) {
    %c0_i32 = arith.constant 0 : i32
    %c0_i32_0 = arith.constant 0 : i32
    %c0_i32_1 = arith.constant 0 : i32
    return %c0_i32, %c0_i32_0 : i32, i32
  }
  func.func @transform_13(%arg0: i32) -> (i32, i32) {
    %c0_i32 = arith.constant 0 : i32
    %c0_i32_0 = arith.constant 0 : i32
    %c0_i32_1 = arith.constant 0 : i32
    return %c0_i32, %c0_i32_0 : i32, i32
  }
  func.func @transform_14(%arg0: i32) -> (i32, i32) {
    %c0_i32 = arith.constant 0 : i32
    %c0_i32_0 = arith.constant 0 : i32
    %c0_i32_1 = arith.constant 0 : i32
    return %c0_i32, %c0_i32_0 : i32, i32
  }
  func.func @transform_15(%arg0: i32) -> (i32, i32) {
    %c0_i32 = arith.constant 0 : i32
    %c0_i32_0 = arith.constant 0 : i32
    %c0_i32_1 = arith.constant 0 : i32
    return %c0_i32, %c0_i32_0 : i32, i32
  }
  func.func @transform_16(%arg0: i32) -> (i32, i32) {
    %c0_i32 = arith.constant 0 : i32
    %c0_i32_0 = arith.constant 0 : i32
    %c0_i32_1 = arith.constant 0 : i32
    return %c0_i32, %c0_i32_0 : i32, i32
  }
  func.func @transform_17(%arg0: i32) -> (i32, i32) {
    %c0_i32 = arith.constant 0 : i32
    %c0_i32_0 = arith.constant 0 : i32
    %c0_i32_1 = arith.constant 0 : i32
    return %c0_i32, %c0_i32_0 : i32, i32
  }
  func.func @transform_18(%arg0: i32) -> (i32, i32) {
    %c0_i32 = arith.constant 0 : i32
    %c0_i32_0 = arith.constant 0 : i32
    %c0_i32_1 = arith.constant 0 : i32
    return %c0_i32, %c0_i32_0 : i32, i32
  }
  func.func @transform_19(%arg0: i32) -> (i32, i32) {
    %c0_i32 = arith.constant 0 : i32
    %c0_i32_0 = arith.constant 0 : i32
    %c0_i32_1 = arith.constant 0 : i32
    return %c0_i32, %c0_i32_0 : i32, i32
  }
  func.func @transform_20(%arg0: i32) -> (i32, i32) {
    %c0_i32 = arith.constant 0 : i32
    %c0_i32_0 = arith.constant 0 : i32
    %c0_i32_1 = arith.constant 0 : i32
    return %c0_i32, %c0_i32_0 : i32, i32
  }
  func.func @transform_21(%arg0: i32) -> (i32, i32, i32) {
    %c0_i32 = arith.constant 0 : i32
    %c0_i32_0 = arith.constant 0 : i32
    %c0_i32_1 = arith.constant 0 : i32
    return %arg0, %c0_i32, %c0_i32_0 : i32, i32, i32
  }
}

</mosaic_0001>

<llo_original>
// kernel: tpu_custom_call.1
$region0: #{tpu_custom_call.1}
  #allocation0 [shape = 'u32[]', space=smem, size = 0x4, offset = 0x4, fixed_abs, tag = 'smem constant byte address 0x4 - core index']
  #allocation1 [shape = 'u32[72,128]{1,0:T(1,128)}', space=vmem, size = 0x9000, scoped, tag = 'internal scratch']
  #allocation2 [shape = 'f32[1,1]{1,0:T(1,128)S(1)}', space=vmem, size = 0x200, scoped, tag = 'scoped memory for tpu_custom_call.1']
  #allocation3 [shape = 'f32[1,1]{1,0:T(1,128)S(1)}', space=vmem, size = 0x200, scoped, tag = 'scoped memory for tpu_custom_call.1']
  #allocation4 [shape = 'f32[1,1]{1,0:T(1,128)S(1)}', space=vmem, size = 0x200, scoped, tag = 'scoped memory for tpu_custom_call.1']
  %s0 = inlined_call_operand.vmem [shape: bf16[2,16,16], index: 0, kind: input, shape index: {}]
  %s1 = inlined_call_operand.vmem [shape: f32[2,16,1], index: 1, kind: input, shape index: {}]
  %s2 = inlined_call_operand.vmem [shape: f32[2,16,8], index: 2, kind: input, shape index: {}]
  %s3 = inlined_call_operand.vmem [shape: f32[8,32], index: 3, kind: input, shape index: {}]
  %s4 = inlined_call_operand.vmem [shape: f32[1,32], index: 4, kind: input, shape index: {}]
  %s5 = inlined_call_operand.vmem [shape: f32[32,1], index: 5, kind: input, shape index: {}]
  %s6 = inlined_call_operand.<no memory space> [shape: f32[1,1], index: 6, kind: input, shape index: {}]
  %s7 = inlined_call_operand.vmem [shape: f32[32,32], index: 7, kind: input, shape index: {}]
  %s8 = inlined_call_operand.vmem [shape: f32[1,32], index: 8, kind: input, shape index: {}]
  %s9 = inlined_call_operand.vmem [shape: f32[32,1], index: 9, kind: input, shape index: {}]
  %s10 = inlined_call_operand.<no memory space> [shape: f32[1,1], index: 10, kind: input, shape index: {}]
  %s11 = inlined_call_operand.vmem [shape: f32[32,32], index: 11, kind: input, shape index: {}]
  %s12 = inlined_call_operand.vmem [shape: f32[1,32], index: 12, kind: input, shape index: {}]
  %s13 = inlined_call_operand.vmem [shape: f32[32,1], index: 13, kind: input, shape index: {}]
  %s14 = inlined_call_operand.<no memory space> [shape: f32[1,1], index: 14, kind: input, shape index: {}]
  %s15 = inlined_call_operand.vmem [shape: f32[64,32], index: 15, kind: input, shape index: {}]
  %s16 = inlined_call_operand.vmem [shape: f32[1,32], index: 16, kind: input, shape index: {}]
  %s17 = inlined_call_operand.vmem [shape: f32[32,16], index: 17, kind: input, shape index: {}]
  %s18 = inlined_call_operand.vmem [shape: f32[1,16], index: 18, kind: input, shape index: {}]
  %s19 = inlined_call_operand.vmem [shape: f32[16,4], index: 19, kind: input, shape index: {}]
  %s20 = inlined_call_operand.vmem [shape: f32[1,4], index: 20, kind: input, shape index: {}]
  %s21 = inlined_call_operand.hbm [shape: f32[2,1,4], index: 21, kind: output, shape index: {}]
  %s22 = sld [smem:[#allocation0]]
  $region117: #{tpu_custom_call.1} parent=0
    _
  %s24 = ssub.s32 1, %s22
  %s25 = scalar_select 0, %s24, %s22
  %v26 = vstv %s6
  %27 = vst [vmem:[#allocation2] sm:$0x1] %v26
  %v28 = vstv %s10
  %29 = vst [vmem:[#allocation3] sm:$0x1] %v28
  %v30 = vstv %s14
  %31 = vst [vmem:[#allocation4] sm:$0x1] %v30
  $region1: #{tpu_custom_call.1} parent=0
    #allocation5 [shape = 'u8[1024]{0}', space=vmem, size = 0x400, scoped, tag = 'output window, operand 0']
    #allocation6 [shape = 's32[2]{0}', space=sflag, size = 0x8, scoped, tag = 'scoped memory for tpu_custom_call.1']
    %32 = vsyncpa [#allocation6], 0
    %s33 = scalar_lea.sflag [#allocation6], 1
    %34 = vsyncpa %s33, 0
    loop: start=0, step=1, limit=4
    $region2: #{tpu_custom_call.1} parent=1 // loop_pre_header
      _
    $region3: #{tpu_custom_call.1} parent=1 // loop_header
      %s36 = sphi 0, %s40
      %p37 = scmp.ge.s32.totalorder %s36, 4
      %s46 = sphi 0, %s48
      %s49 = sphi 0, %s46
      %s50 = sphi 0, %s49
      %s66 = sphi 0, %s50
      %s72 = sphi 0, %s74
      %s75 = sphi 0, %s72
      %s76 = sphi 0, %s75
      %s92 = sphi 0, %s76
      %s98 = sphi 0, %s100
      %s101 = sphi 0, %s98
      %s102 = sphi 0, %s101
      %s118 = sphi 0, %s102
      %s122 = sphi 0, %s122
      %s124 = sphi 0, %s122
      %s125 = sphi 0, %s124
      %s139 = sphi 0, %s125
      %s143 = sphi 0, %s143
      %s145 = sphi 0, %s143
      %s146 = sphi 0, %s145
      %s160 = sphi 0, %s146
      %s164 = sphi 0, %s164
      %s166 = sphi 0, %s164
      %s167 = sphi 0, %s166
      %s181 = sphi 0, %s167
      %s185 = sphi 0, %s185
      %s187 = sphi 0, %s185
      %s188 = sphi 0, %s187
      %s202 = sphi 0, %s188
      %s206 = sphi 0, %s206
      %s208 = sphi 0, %s206
      %s209 = sphi 0, %s208
      %s223 = sphi 0, %s209
      %s227 = sphi 0, %s227
      %s229 = sphi 0, %s227
      %s230 = sphi 0, %s229
      %s244 = sphi 0, %s230
      %s248 = sphi 0, %s248
      %s250 = sphi 0, %s248
      %s251 = sphi 0, %s250
      %s265 = sphi 0, %s251
      %s269 = sphi 0, %s269
      %s271 = sphi 0, %s269
      %s272 = sphi 0, %s271
      %s286 = sphi 0, %s272
      %s290 = sphi 0, %s290
      %s292 = sphi 0, %s290
      %s293 = sphi 0, %s292
      %s307 = sphi 0, %s293
      %s311 = sphi 0, %s311
      %s313 = sphi 0, %s311
      %s314 = sphi 0, %s313
      %s328 = sphi 0, %s314
      %s332 = sphi 0, %s332
      %s334 = sphi 0, %s332
      %s335 = sphi 0, %s334
      %s349 = sphi 0, %s335
      %s353 = sphi 0, %s353
      %s355 = sphi 0, %s353
      %s356 = sphi 0, %s355
      %s370 = sphi 0, %s356
      %s374 = sphi 0, %s374
      %s376 = sphi 0, %s374
      %s377 = sphi 0, %s376
      %s391 = sphi 0, %s377
      %s395 = sphi 0, %s395
      %s397 = sphi 0, %s395
      %s398 = sphi 0, %s397
      %s412 = sphi 0, %s398
      %s416 = sphi 0, %s416
      %s418 = sphi 0, %s416
      %s419 = sphi 0, %s418
      %s433 = sphi 0, %s419
      %s437 = sphi 0, %s437
      %s439 = sphi 0, %s437
      %s440 = sphi 0, %s439
      %s454 = sphi 0, %s440
      %s458 = sphi 0, %s458
      %s460 = sphi 0, %s458
      %s461 = sphi 0, %s460
      %s475 = sphi 0, %s461
      %s479 = sphi 0, %s479
      %s481 = sphi 0, %s479
      %s482 = sphi 0, %s481
      %s496 = sphi 0, %s482
      %s502 = sphi 0, %s504
      %s505 = sphi 0, %s502
      %s506 = sphi 0, %s505
      %s522 = sphi 0, %s506
    $region4: #{tpu_custom_call.1} parent=1 // loop_header_branch
      %39 = sbr.rel (%p37) target = $region8
    $region5: #{tpu_custom_call.1} parent=1 // loop_body
      %s41 = ssub.s32 %s36, 1
      %s42 = ssub.s32 %s36, 2
      %s43 = sadd.s32 %s36, 1
      %s44 = ssub.s32 %s36, %s43
      %p45 = scmp.eq.s32.totalorder %s44, 0
      %s47 = sadd.s32 %s46, 1
      %s48 = scalar_select %p45, %s46, %s47
      %p51 = pneg %p45
      %p52 = scmp.eq.s32.totalorder %s36, 1
      %p53 = por %p51, %p52
      %p54 = scmp.ne.s32.totalorder %s46, %s49
      %p55 = scmp.eq.s32.totalorder %s36, 0
      %p56 = por %p54, %p55
      %p57 = scmp.ne.s32.totalorder %s46, %s49
      %p58 = scmp.eq.s32.totalorder %s41, 1
      %p59 = por %p57, %p58
      %p60 = scmp.ne.s32.totalorder %s49, %s50
      %p61 = scmp.eq.s32.totalorder %s41, 0
      %p62 = por %p60, %p61
      %p63 = scmp.ne.s32.totalorder %s49, %s50
      %p64 = scmp.eq.s32.totalorder %s42, 1
      %p65 = por %p63, %p64
      %p67 = scmp.ne.s32.totalorder %s50, %s66
      %p68 = scmp.eq.s32.totalorder %s42, 0
      %p69 = por %p67, %p68
      %s70 = ssub.s32 %s36, %s43
      %p71 = scmp.eq.s32.totalorder %s70, 0
      %s73 = sadd.s32 %s72, 1
      %s74 = scalar_select %p71, %s72, %s73
      %p77 = pneg %p71
      %p78 = scmp.eq.s32.totalorder %s36, 1
      %p79 = por %p77, %p78
      %p80 = scmp.ne.s32.totalorder %s72, %s75
      %p81 = scmp.eq.s32.totalorder %s36, 0
      %p82 = por %p80, %p81
      %p83 = scmp.ne.s32.totalorder %s72, %s75
      %p84 = scmp.eq.s32.totalorder %s41, 1
      %p85 = por %p83, %p84
      %p86 = scmp.ne.s32.totalorder %s75, %s76
      %p87 = scmp.eq.s32.totalorder %s41, 0
      %p88 = por %p86, %p87
      %p89 = scmp.ne.s32.totalorder %s75, %s76
      %p90 = scmp.eq.s32.totalorder %s42, 1
      %p91 = por %p89, %p90
      %p93 = scmp.ne.s32.totalorder %s76, %s92
      %p94 = scmp.eq.s32.totalorder %s42, 0
      %p95 = por %p93, %p94
      %s96 = ssub.s32 %s36, %s43
      %p97 = scmp.eq.s32.totalorder %s96, 0
      %s99 = sadd.s32 %s98, 1
      %s100 = scalar_select %p97, %s98, %s99
      %p103 = pneg %p97
      %p104 = scmp.eq.s32.totalorder %s36, 1
      %p105 = por %p103, %p104
      %p106 = scmp.ne.s32.totalorder %s98, %s101
      %p107 = scmp.eq.s32.totalorder %s36, 0
      %p108 = por %p106, %p107
      %p109 = scmp.ne.s32.totalorder %s98, %s101
      %p110 = scmp.eq.s32.totalorder %s41, 1
      %p111 = por %p109, %p110
      %p112 = scmp.ne.s32.totalorder %s101, %s102
      %p113 = scmp.eq.s32.totalorder %s41, 0
      %p114 = por %p112, %p113
      %p115 = scmp.ne.s32.totalorder %s101, %s102
      %p116 = scmp.eq.s32.totalorder %s42, 1
      %p117 = por %p115, %p116
      %p119 = scmp.ne.s32.totalorder %s102, %s118
      %p120 = scmp.eq.s32.totalorder %s42, 0
      %p121 = por %p119, %p120
      %s123 = sadd.s32 %s122, 1
      %p126 = scmp.eq.s32.totalorder %s36, 1
      %p127 = scmp.ne.s32.totalorder %s122, %s124
      %p128 = scmp.eq.s32.totalorder %s36, 0
      %p129 = por %p127, %p128
      %p130 = scmp.ne.s32.totalorder %s122, %s124
      %p131 = scmp.eq.s32.totalorder %s41, 1
      %p132 = por %p130, %p131
      %p133 = scmp.ne.s32.totalorder %s124, %s125
      %p134 = scmp.eq.s32.totalorder %s41, 0
      %p135 = por %p133, %p134
      %p136 = scmp.ne.s32.totalorder %s124, %s125
      %p137 = scmp.eq.s32.totalorder %s42, 1
      %p138 = por %p136, %p137
      %p140 = scmp.ne.s32.totalorder %s125, %s139
      %p141 = scmp.eq.s32.totalorder %s42, 0
      %p142 = por %p140, %p141
      %s144 = sadd.s32 %s143, 1
      %p147 = scmp.eq.s32.totalorder %s36, 1
      %p148 = scmp.ne.s32.totalorder %s143, %s145
      %p149 = scmp.eq.s32.totalorder %s36, 0
      %p150 = por %p148, %p149
      %p151 = scmp.ne.s32.totalorder %s143, %s145
      %p152 = scmp.eq.s32.totalorder %s41, 1
      %p153 = por %p151, %p152
      %p154 = scmp.ne.s32.totalorder %s145, %s146
      %p155 = scmp.eq.s32.totalorder %s41, 0
      %p156 = por %p154, %p155
      %p157 = scmp.ne.s32.totalorder %s145, %s146
      %p158 = scmp.eq.s32.totalorder %s42, 1
      %p159 = por %p157, %p158
      %p161 = scmp.ne.s32.totalorder %s146, %s160
      %p162 = scmp.eq.s32.totalorder %s42, 0
      %p163 = por %p161, %p162
      %s165 = sadd.s32 %s164, 1
      %p168 = scmp.eq.s32.totalorder %s36, 1
      %p169 = scmp.ne.s32.totalorder %s164, %s166
      %p170 = scmp.eq.s32.totalorder %s36, 0
      %p171 = por %p169, %p170
      %p172 = scmp.ne.s32.totalorder %s164, %s166
      %p173 = scmp.eq.s32.totalorder %s41, 1
      %p174 = por %p172, %p173
      %p175 = scmp.ne.s32.totalorder %s166, %s167
      %p176 = scmp.eq.s32.totalorder %s41, 0
      %p177 = por %p175, %p176
      %p178 = scmp.ne.s32.totalorder %s166, %s167
      %p179 = scmp.eq.s32.totalorder %s42, 1
      %p180 = por %p178, %p179
      %p182 = scmp.ne.s32.totalorder %s167, %s181
      %p183 = scmp.eq.s32.totalorder %s42, 0
      %p184 = por %p182, %p183
      %s186 = sadd.s32 %s185, 1
      %p189 = scmp.eq.s32.totalorder %s36, 1
      %p190 = scmp.ne.s32.totalorder %s185, %s187
      %p191 = scmp.eq.s32.totalorder %s36, 0
      %p192 = por %p190, %p191
      %p193 = scmp.ne.s32.totalorder %s185, %s187
      %p194 = scmp.eq.s32.totalorder %s41, 1
      %p195 = por %p193, %p194
      %p196 = scmp.ne.s32.totalorder %s187, %s188
      %p197 = scmp.eq.s32.totalorder %s41, 0
      %p198 = por %p196, %p197
      %p199 = scmp.ne.s32.totalorder %s187, %s188
      %p200 = scmp.eq.s32.totalorder %s42, 1
      %p201 = por %p199, %p200
      %p203 = scmp.ne.s32.totalorder %s188, %s202
      %p204 = scmp.eq.s32.totalorder %s42, 0
      %p205 = por %p203, %p204
      %s207 = sadd.s32 %s206, 1
      %p210 = scmp.eq.s32.totalorder %s36, 1
      %p211 = scmp.ne.s32.totalorder %s206, %s208
      %p212 = scmp.eq.s32.totalorder %s36, 0
      %p213 = por %p211, %p212
      %p214 = scmp.ne.s32.totalorder %s206, %s208
      %p215 = scmp.eq.s32.totalorder %s41, 1
      %p216 = por %p214, %p215
      %p217 = scmp.ne.s32.totalorder %s208, %s209
      %p218 = scmp.eq.s32.totalorder %s41, 0
      %p219 = por %p217, %p218
      %p220 = scmp.ne.s32.totalorder %s208, %s209
      %p221 = scmp.eq.s32.totalorder %s42, 1
      %p222 = por %p220, %p221
      %p224 = scmp.ne.s32.totalorder %s209, %s223
      %p225 = scmp.eq.s32.totalorder %s42, 0
      %p226 = por %p224, %p225
      %s228 = sadd.s32 %s227, 1
      %p231 = scmp.eq.s32.totalorder %s36, 1
      %p232 = scmp.ne.s32.totalorder %s227, %s229
      %p233 = scmp.eq.s32.totalorder %s36, 0
      %p234 = por %p232, %p233
      %p235 = scmp.ne.s32.totalorder %s227, %s229
      %p236 = scmp.eq.s32.totalorder %s41, 1
      %p237 = por %p235, %p236
      %p238 = scmp.ne.s32.totalorder %s229, %s230
      %p239 = scmp.eq.s32.totalorder %s41, 0
      %p240 = por %p238, %p239
      %p241 = scmp.ne.s32.totalorder %s229, %s230
      %p242 = scmp.eq.s32.totalorder %s42, 1
      %p243 = por %p241, %p242
      %p245 = scmp.ne.s32.totalorder %s230, %s244
      %p246 = scmp.eq.s32.totalorder %s42, 0
      %p247 = por %p245, %p246
      %s249 = sadd.s32 %s248, 1
      %p252 = scmp.eq.s32.totalorder %s36, 1
      %p253 = scmp.ne.s32.totalorder %s248, %s250
      %p254 = scmp.eq.s32.totalorder %s36, 0
      %p255 = por %p253, %p254
      %p256 = scmp.ne.s32.totalorder %s248, %s250
      %p257 = scmp.eq.s32.totalorder %s41, 1
      %p258 = por %p256, %p257
      %p259 = scmp.ne.s32.totalorder %s250, %s251
      %p260 = scmp.eq.s32.totalorder %s41, 0
      %p261 = por %p259, %p260
      %p262 = scmp.ne.s32.totalorder %s250, %s251
      %p263 = scmp.eq.s32.totalorder %s42, 1
      %p264 = por %p262, %p263
      %p266 = scmp.ne.s32.totalorder %s251, %s265
      %p267 = scmp.eq.s32.totalorder %s42, 0
      %p268 = por %p266, %p267
      %s270 = sadd.s32 %s269, 1
      %p273 = scmp.eq.s32.totalorder %s36, 1
      %p274 = scmp.ne.s32.totalorder %s269, %s271
      %p275 = scmp.eq.s32.totalorder %s36, 0
      %p276 = por %p274, %p275
      %p277 = scmp.ne.s32.totalorder %s269, %s271
      %p278 = scmp.eq.s32.totalorder %s41, 1
      %p279 = por %p277, %p278
      %p280 = scmp.ne.s32.totalorder %s271, %s272
      %p281 = scmp.eq.s32.totalorder %s41, 0
      %p282 = por %p280, %p281
      %p283 = scmp.ne.s32.totalorder %s271, %s272
      %p284 = scmp.eq.s32.totalorder %s42, 1
      %p285 = por %p283, %p284
      %p287 = scmp.ne.s32.totalorder %s272, %s286
      %p288 = scmp.eq.s32.totalorder %s42, 0
      %p289 = por %p287, %p288
      %s291 = sadd.s32 %s290, 1
      %p294 = scmp.eq.s32.totalorder %s36, 1
      %p295 = scmp.ne.s32.totalorder %s290, %s292
      %p296 = scmp.eq.s32.totalorder %s36, 0
      %p297 = por %p295, %p296
      %p298 = scmp.ne.s32.totalorder %s290, %s292
      %p299 = scmp.eq.s32.totalorder %s41, 1
      %p300 = por %p298, %p299
      %p301 = scmp.ne.s32.totalorder %s292, %s293
      %p302 = scmp.eq.s32.totalorder %s41, 0
      %p303 = por %p301, %p302
      %p304 = scmp.ne.s32.totalorder %s292, %s293
      %p305 = scmp.eq.s32.totalorder %s42, 1
      %p306 = por %p304, %p305
      %p308 = scmp.ne.s32.totalorder %s293, %s307
      %p309 = scmp.eq.s32.totalorder %s42, 0
      %p310 = por %p308, %p309
      %s312 = sadd.s32 %s311, 1
      %p315 = scmp.eq.s32.totalorder %s36, 1
      %p316 = scmp.ne.s32.totalorder %s311, %s313
      %p317 = scmp.eq.s32.totalorder %s36, 0
      %p318 = por %p316, %p317
      %p319 = scmp.ne.s32.totalorder %s311, %s313
      %p320 = scmp.eq.s32.totalorder %s41, 1
      %p321 = por %p319, %p320
      %p322 = scmp.ne.s32.totalorder %s313, %s314
      %p323 = scmp.eq.s32.totalorder %s41, 0
      %p324 = por %p322, %p323
      %p325 = scmp.ne.s32.totalorder %s313, %s314
      %p326 = scmp.eq.s32.totalorder %s42, 1
      %p327 = por %p325, %p326
      %p329 = scmp.ne.s32.totalorder %s314, %s328
      %p330 = scmp.eq.s32.totalorder %s42, 0
      %p331 = por %p329, %p330
      %s333 = sadd.s32 %s332, 1
      %p336 = scmp.eq.s32.totalorder %s36, 1
      %p337 = scmp.ne.s32.totalorder %s332, %s334
      %p338 = scmp.eq.s32.totalorder %s36, 0
      %p339 = por %p337, %p338
      %p340 = scmp.ne.s32.totalorder %s332, %s334
      %p341 = scmp.eq.s32.totalorder %s41, 1
      %p342 = por %p340, %p341
      %p343 = scmp.ne.s32.totalorder %s334, %s335
      %p344 = scmp.eq.s32.totalorder %s41, 0
      %p345 = por %p343, %p344
      %p346 = scmp.ne.s32.totalorder %s334, %s335
      %p347 = scmp.eq.s32.totalorder %s42, 1
      %p348 = por %p346, %p347
      %p350 = scmp.ne.s32.totalorder %s335, %s349
      %p351 = scmp.eq.s32.totalorder %s42, 0
      %p352 = por %p350, %p351
      %s354 = sadd.s32 %s353, 1
      %p357 = scmp.eq.s32.totalorder %s36, 1
      %p358 = scmp.ne.s32.totalorder %s353, %s355
      %p359 = scmp.eq.s32.totalorder %s36, 0
      %p360 = por %p358, %p359
      %p361 = scmp.ne.s32.totalorder %s353, %s355
      %p362 = scmp.eq.s32.totalorder %s41, 1
      %p363 = por %p361, %p362
      %p364 = scmp.ne.s32.totalorder %s355, %s356
      %p365 = scmp.eq.s32.totalorder %s41, 0
      %p366 = por %p364, %p365
      %p367 = scmp.ne.s32.totalorder %s355, %s356
      %p368 = scmp.eq.s32.totalorder %s42, 1
      %p369 = por %p367, %p368
      %p371 = scmp.ne.s32.totalorder %s356, %s370
      %p372 = scmp.eq.s32.totalorder %s42, 0
      %p373 = por %p371, %p372
      %s375 = sadd.s32 %s374, 1
      %p378 = scmp.eq.s32.totalorder %s36, 1
      %p379 = scmp.ne.s32.totalorder %s374, %s376
      %p380 = scmp.eq.s32.totalorder %s36, 0
      %p381 = por %p379, %p380
      %p382 = scmp.ne.s32.totalorder %s374, %s376
      %p383 = scmp.eq.s32.totalorder %s41, 1
      %p384 = por %p382, %p383
      %p385 = scmp.ne.s32.totalorder %s376, %s377
      %p386 = scmp.eq.s32.totalorder %s41, 0
      %p387 = por %p385, %p386
      %p388 = scmp.ne.s32.totalorder %s376, %s377
      %p389 = scmp.eq.s32.totalorder %s42, 1
      %p390 = por %p388, %p389
      %p392 = scmp.ne.s32.totalorder %s377, %s391
      %p393 = scmp.eq.s32.totalorder %s42, 0
      %p394 = por %p392, %p393
      %s396 = sadd.s32 %s395, 1
      %p399 = scmp.eq.s32.totalorder %s36, 1
      %p400 = scmp.ne.s32.totalorder %s395, %s397
      %p401 = scmp.eq.s32.totalorder %s36, 0
      %p402 = por %p400, %p401
      %p403 = scmp.ne.s32.totalorder %s395, %s397
      %p404 = scmp.eq.s32.totalorder %s41, 1
      %p405 = por %p403, %p404
      %p406 = scmp.ne.s32.totalorder %s397, %s398
      %p407 = scmp.eq.s32.totalorder %s41, 0
      %p408 = por %p406, %p407
      %p409 = scmp.ne.s32.totalorder %s397, %s398
      %p410 = scmp.eq.s32.totalorder %s42, 1
      %p411 = por %p409, %p410
      %p413 = scmp.ne.s32.totalorder %s398, %s412
      %p414 = scmp.eq.s32.totalorder %s42, 0
      %p415 = por %p413, %p414
      %s417 = sadd.s32 %s416, 1
      %p420 = scmp.eq.s32.totalorder %s36, 1
      %p421 = scmp.ne.s32.totalorder %s416, %s418
      %p422 = scmp.eq.s32.totalorder %s36, 0
      %p423 = por %p421, %p422
      %p424 = scmp.ne.s32.totalorder %s416, %s418
      %p425 = scmp.eq.s32.totalorder %s41, 1
      %p426 = por %p424, %p425
      %p427 = scmp.ne.s32.totalorder %s418, %s419
      %p428 = scmp.eq.s32.totalorder %s41, 0
      %p429 = por %p427, %p428
      %p430 = scmp.ne.s32.totalorder %s418, %s419
      %p431 = scmp.eq.s32.totalorder %s42, 1
      %p432 = por %p430, %p431
      %p434 = scmp.ne.s32.totalorder %s419, %s433
      %p435 = scmp.eq.s32.totalorder %s42, 0
      %p436 = por %p434, %p435
      %s438 = sadd.s32 %s437, 1
      %p441 = scmp.eq.s32.totalorder %s36, 1
      %p442 = scmp.ne.s32.totalorder %s437, %s439
      %p443 = scmp.eq.s32.totalorder %s36, 0
      %p444 = por %p442, %p443
      %p445 = scmp.ne.s32.totalorder %s437, %s439
      %p446 = scmp.eq.s32.totalorder %s41, 1
      %p447 = por %p445, %p446
      %p448 = scmp.ne.s32.totalorder %s439, %s440
      %p449 = scmp.eq.s32.totalorder %s41, 0
      %p450 = por %p448, %p449
      %p451 = scmp.ne.s32.totalorder %s439, %s440
      %p452 = scmp.eq.s32.totalorder %s42, 1
      %p453 = por %p451, %p452
      %p455 = scmp.ne.s32.totalorder %s440, %s454
      %p456 = scmp.eq.s32.totalorder %s42, 0
      %p457 = por %p455, %p456
      %s459 = sadd.s32 %s458, 1
      %p462 = scmp.eq.s32.totalorder %s36, 1
      %p463 = scmp.ne.s32.totalorder %s458, %s460
      %p464 = scmp.eq.s32.totalorder %s36, 0
      %p465 = por %p463, %p464
      %p466 = scmp.ne.s32.totalorder %s458, %s460
      %p467 = scmp.eq.s32.totalorder %s41, 1
      %p468 = por %p466, %p467
      %p469 = scmp.ne.s32.totalorder %s460, %s461
      %p470 = scmp.eq.s32.totalorder %s41, 0
      %p471 = por %p469, %p470
      %p472 = scmp.ne.s32.totalorder %s460, %s461
      %p473 = scmp.eq.s32.totalorder %s42, 1
      %p474 = por %p472, %p473
      %p476 = scmp.ne.s32.totalorder %s461, %s475
      %p477 = scmp.eq.s32.totalorder %s42, 0
      %p478 = por %p476, %p477
      %s480 = sadd.s32 %s479, 1
      %p483 = scmp.eq.s32.totalorder %s36, 1
      %p484 = scmp.ne.s32.totalorder %s479, %s481
      %p485 = scmp.eq.s32.totalorder %s36, 0
      %p486 = por %p484, %p485
      %p487 = scmp.ne.s32.totalorder %s479, %s481
      %p488 = scmp.eq.s32.totalorder %s41, 1
      %p489 = por %p487, %p488
      %p490 = scmp.ne.s32.totalorder %s481, %s482
      %p491 = scmp.eq.s32.totalorder %s41, 0
      %p492 = por %p490, %p491
      %p493 = scmp.ne.s32.totalorder %s481, %s482
      %p494 = scmp.eq.s32.totalorder %s42, 1
      %p495 = por %p493, %p494
      %p497 = scmp.ne.s32.totalorder %s482, %s496
      %p498 = scmp.eq.s32.totalorder %s42, 0
      %p499 = por %p497, %p498
      %s500 = ssub.s32 %s36, %s43
      %p501 = scmp.eq.s32.totalorder %s500, 0
      %s503 = sadd.s32 %s502, 1
      %s504 = scalar_select %p501, %s502, %s503
      %p507 = pneg %p501
      %p508 = scmp.eq.s32.totalorder %s36, 1
      %p509 = por %p507, %p508
      %p510 = scmp.ne.s32.totalorder %s502, %s505
      %p511 = scmp.eq.s32.totalorder %s36, 0
      %p512 = por %p510, %p511
      %p513 = scmp.ne.s32.totalorder %s502, %s505
      %p514 = scmp.eq.s32.totalorder %s41, 1
      %p515 = por %p513, %p514
      %p516 = scmp.ne.s32.totalorder %s505, %s506
      %p517 = scmp.eq.s32.totalorder %s41, 0
      %p518 = por %p516, %p517
      %p519 = scmp.ne.s32.totalorder %s505, %s506
      %p520 = scmp.eq.s32.totalorder %s42, 1
      %p521 = por %p519, %p520
      %p523 = scmp.ne.s32.totalorder %s506, %s522
      %p524 = scmp.eq.s32.totalorder %s42, 0
      %p525 = por %p523, %p524
      %p526 = scmp.le.s32.totalorder 1, %s36
      %p527 = scmp.lt.s32.totalorder %s36, 3
      %p528 = pnand %p526, %p527
      %p529 = pneg %p528
      // Predicated region
      $region9: #{tpu_custom_call.1} parent=5 // pred_check
        _
      $region10: #{tpu_custom_call.1} parent=5 // pred_check_branch
        %531 = sbr.rel (%p528) target = $region12
      $region11: #{tpu_custom_call.1} parent=5 // pred_region
        %s532 = ssub.s32 %s36, 1
        // Predicated region
        $region13: #{tpu_custom_call.1} parent=11 // pred_check
          %p533 = pneg %p135
        $region14: #{tpu_custom_call.1} parent=11 // pred_check_branch
          %535 = sbr.rel (%p533) target = $region16
        $region15: #{tpu_custom_call.1} parent=11 // pred_region
          _
        $region16: #{tpu_custom_call.1} parent=11 // pred_fallthru
          _
        // Predicated region
        $region17: #{tpu_custom_call.1} parent=11 // pred_check
          %p536 = pneg %p156
        $region18: #{tpu_custom_call.1} parent=11 // pred_check_branch
          %538 = sbr.rel (%p536) target = $region20
        $region19: #{tpu_custom_call.1} parent=11 // pred_region
          _
        $region20: #{tpu_custom_call.1} parent=11 // pred_fallthru
          _
        // Predicated region
        $region21: #{tpu_custom_call.1} parent=11 // pred_check
          %p539 = pneg %p177
        $region22: #{tpu_custom_call.1} parent=11 // pred_check_branch
          %541 = sbr.rel (%p539) target = $region24
        $region23: #{tpu_custom_call.1} parent=11 // pred_region
          _
        $region24: #{tpu_custom_call.1} parent=11 // pred_fallthru
          _
        // Predicated region
        $region25: #{tpu_custom_call.1} parent=11 // pred_check
          %p542 = pneg %p198
        $region26: #{tpu_custom_call.1} parent=11 // pred_check_branch
          %544 = sbr.rel (%p542) target = $region28
        $region27: #{tpu_custom_call.1} parent=11 // pred_region
          _
        $region28: #{tpu_custom_call.1} parent=11 // pred_fallthru
          _
        // Predicated region
        $region29: #{tpu_custom_call.1} parent=11 // pred_check
          %p545 = pneg %p219
        $region30: #{tpu_custom_call.1} parent=11 // pred_check_branch
          %547 = sbr.rel (%p545) target = $region32
        $region31: #{tpu_custom_call.1} parent=11 // pred_region
          _
        $region32: #{tpu_custom_call.1} parent=11 // pred_fallthru
          _
        // Predicated region
        $region33: #{tpu_custom_call.1} parent=11 // pred_check
          %p548 = pneg %p240
        $region34: #{tpu_custom_call.1} parent=11 // pred_check_branch
          %550 = sbr.rel (%p548) target = $region36
        $region35: #{tpu_custom_call.1} parent=11 // pred_region
          _
        $region36: #{tpu_custom_call.1} parent=11 // pred_fallthru
          _
        // Predicated region
        $region37: #{tpu_custom_call.1} parent=11 // pred_check
          %p551 = pneg %p261
        $region38: #{tpu_custom_call.1} parent=11 // pred_check_branch
          %553 = sbr.rel (%p551) target = $region40
        $region39: #{tpu_custom_call.1} parent=11 // pred_region
          _
        $region40: #{tpu_custom_call.1} parent=11 // pred_fallthru
          _
        // Predicated region
        $region41: #{tpu_custom_call.1} parent=11 // pred_check
          %p554 = pneg %p282
        $region42: #{tpu_custom_call.1} parent=11 // pred_check_branch
          %556 = sbr.rel (%p554) target = $region44
        $region43: #{tpu_custom_call.1} parent=11 // pred_region
          _
        $region44: #{tpu_custom_call.1} parent=11 // pred_fallthru
          _
        // Predicated region
        $region45: #{tpu_custom_call.1} parent=11 // pred_check
          %p557 = pneg %p303
        $region46: #{tpu_custom_call.1} parent=11 // pred_check_branch
          %559 = sbr.rel (%p557) target = $region48
        $region47: #{tpu_custom_call.1} parent=11 // pred_region
          _
        $region48: #{tpu_custom_call.1} parent=11 // pred_fallthru
          _
        // Predicated region
        $region49: #{tpu_custom_call.1} parent=11 // pred_check
          %p560 = pneg %p324
        $region50: #{tpu_custom_call.1} parent=11 // pred_check_branch
          %562 = sbr.rel (%p560) target = $region52
        $region51: #{tpu_custom_call.1} parent=11 // pred_region
          _
        $region52: #{tpu_custom_call.1} parent=11 // pred_fallthru
          _
        // Predicated region
        $region53: #{tpu_custom_call.1} parent=11 // pred_check
          %p563 = pneg %p345
        $region54: #{tpu_custom_call.1} parent=11 // pred_check_branch
          %565 = sbr.rel (%p563) target = $region56
        $region55: #{tpu_custom_call.1} parent=11 // pred_region
          _
        $region56: #{tpu_custom_call.1} parent=11 // pred_fallthru
          _
        // Predicated region
        $region57: #{tpu_custom_call.1} parent=11 // pred_check
          %p566 = pneg %p366
        $region58: #{tpu_custom_call.1} parent=11 // pred_check_branch
          %568 = sbr.rel (%p566) target = $region60
        $region59: #{tpu_custom_call.1} parent=11 // pred_region
          _
        $region60: #{tpu_custom_call.1} parent=11 // pred_fallthru
          _
        // Predicated region
        $region61: #{tpu_custom_call.1} parent=11 // pred_check
          %p569 = pneg %p387
        $region62: #{tpu_custom_call.1} parent=11 // pred_check_branch
          %571 = sbr.rel (%p569) target = $region64
        $region63: #{tpu_custom_call.1} parent=11 // pred_region
          _
        $region64: #{tpu_custom_call.1} parent=11 // pred_fallthru
          _
        // Predicated region
        $region65: #{tpu_custom_call.1} parent=11 // pred_check
          %p572 = pneg %p408
        $region66: #{tpu_custom_call.1} parent=11 // pred_check_branch
          %574 = sbr.rel (%p572) target = $region68
        $region67: #{tpu_custom_call.1} parent=11 // pred_region
          _
        $region68: #{tpu_custom_call.1} parent=11 // pred_fallthru
          _
        // Predicated region
        $region69: #{tpu_custom_call.1} parent=11 // pred_check
          %p575 = pneg %p429
        $region70: #{tpu_custom_call.1} parent=11 // pred_check_branch
          %577 = sbr.rel (%p575) target = $region72
        $region71: #{tpu_custom_call.1} parent=11 // pred_region
          _
        $region72: #{tpu_custom_call.1} parent=11 // pred_fallthru
          _
        // Predicated region
        $region73: #{tpu_custom_call.1} parent=11 // pred_check
          %p578 = pneg %p450
        $region74: #{tpu_custom_call.1} parent=11 // pred_check_branch
          %580 = sbr.rel (%p578) target = $region76
        $region75: #{tpu_custom_call.1} parent=11 // pred_region
          _
        $region76: #{tpu_custom_call.1} parent=11 // pred_fallthru
          _
        // Predicated region
        $region77: #{tpu_custom_call.1} parent=11 // pred_check
          %p581 = pneg %p471
        $region78: #{tpu_custom_call.1} parent=11 // pred_check_branch
          %583 = sbr.rel (%p581) target = $region80
        $region79: #{tpu_custom_call.1} parent=11 // pred_region
          _
        $region80: #{tpu_custom_call.1} parent=11 // pred_fallthru
          _
        // Predicated region
        $region81: #{tpu_custom_call.1} parent=11 // pred_check
          %p584 = pneg %p492
        $region82: #{tpu_custom_call.1} parent=11 // pred_check_branch
          %586 = sbr.rel (%p584) target = $region84
        $region83: #{tpu_custom_call.1} parent=11 // pred_region
          _
        $region84: #{tpu_custom_call.1} parent=11 // pred_fallthru
          _
      $region12: #{tpu_custom_call.1} parent=5 // pred_fallthru
        _
      %p587 = scmp.lt.s32.totalorder %s36, 2
      // Predicated region
      $region85: #{tpu_custom_call.1} parent=5 // pred_check
        %p588 = pneg %p587
      $region86: #{tpu_custom_call.1} parent=5 // pred_check_branch
        %590 = sbr.rel (%p588) target = $region88
      $region87: #{tpu_custom_call.1} parent=5 // pred_region
        // Predicated region
        $region89: #{tpu_custom_call.1} parent=87 // pred_check
          %p591 = pneg %p56
        $region90: #{tpu_custom_call.1} parent=87 // pred_check_branch
          %593 = sbr.rel (%p591) target = $region92
        $region91: #{tpu_custom_call.1} parent=87 // pred_region
          %p594 = scmp.lt.s32.totalorder %s36, 1
          %s595 = scalar_select %p594, %s36, 1
          %s596 = smul.addr %s595, 2
          %s597 = smul.addr %s596, 4
          %s598 = scalar_lea.vmem %s0, %s597
        $region92: #{tpu_custom_call.1} parent=87 // pred_fallthru
          _
        // Predicated region
        $region93: #{tpu_custom_call.1} parent=87 // pred_check
          %p599 = pneg %p82
        $region94: #{tpu_custom_call.1} parent=87 // pred_check_branch
          %601 = sbr.rel (%p599) target = $region96
        $region95: #{tpu_custom_call.1} parent=87 // pred_region
          %p602 = scmp.lt.s32.totalorder %s36, 1
          %s603 = scalar_select %p602, %s36, 1
          %s604 = smul.addr %s603, 2
          %s605 = smul.addr %s604, 8
          %s606 = scalar_lea.vmem %s1, %s605
        $region96: #{tpu_custom_call.1} parent=87 // pred_fallthru
          _
        // Predicated region
        $region97: #{tpu_custom_call.1} parent=87 // pred_check
          %p607 = pneg %p108
        $region98: #{tpu_custom_call.1} parent=87 // pred_check_branch
          %609 = sbr.rel (%p607) target = $region100
        $region99: #{tpu_custom_call.1} parent=87 // pred_region
          %p610 = scmp.lt.s32.totalorder %s36, 1
          %s611 = scalar_select %p610, %s36, 1
          %s612 = smul.addr %s611, 2
          %s613 = smul.addr %s612, 8
          %s614 = scalar_lea.vmem %s2, %s613
        $region100: #{tpu_custom_call.1} parent=87 // pred_fallthru
          _
      $region88: #{tpu_custom_call.1} parent=5 // pred_fallthru
        _
      %p615 = scmp.le.s32.totalorder 1, %s36
      %p616 = scmp.lt.s32.totalorder %s36, 3
      %p617 = pnand %p615, %p616
      %p618 = pneg %p617
      // Predicated region
      $region101: #{tpu_custom_call.1} parent=5 // pred_check
        _
      $region102: #{tpu_custom_call.1} parent=5 // pred_check_branch
        %620 = sbr.rel (%p617) target = $region104
      $region103: #{tpu_custom_call.1} parent=5 // pred_region
        %s621 = ssub.s32 %s36, 1
        %p622 = scmp.lt.s32.totalorder %s41, 1
        %s623 = scalar_select %p622, %s41, 1
        %s624 = smul.addr %s623, 2
        %s625 = smul.addr %s624, 4
        %s626 = scalar_lea.vmem %s0, %s625
        %p627 = pneg %p62
        %p628 = pneg %p59
        %p629 = scmp.lt.s32.totalorder %s41, 1
        %s630 = scalar_select %p629, %s41, 1
        %s631 = smul.addr %s630, 2
        %s632 = smul.addr %s631, 8
        %s633 = scalar_lea.vmem %s1, %s632
        %p634 = pneg %p88
        %p635 = pneg %p85
        %p636 = scmp.lt.s32.totalorder %s41, 1
        %s637 = scalar_select %p636, %s41, 1
        %s638 = smul.addr %s637, 2
        %s639 = smul.addr %s638, 8
        %s640 = scalar_lea.vmem %s2, %s639
        %p641 = pneg %p114
        %p642 = pneg %p111
        %p643 = pneg %p135
        %p644 = pneg %p132
        %p645 = pneg %p156
        %p646 = pneg %p153
        %p647 = pneg %p177
        %p648 = pneg %p174
        %p649 = pneg %p198
        %p650 = pneg %p195
        %p651 = pneg %p219
        %p652 = pneg %p216
        %p653 = pneg %p240
        %p654 = pneg %p237
        %p655 = pneg %p261
        %p656 = pneg %p258
        %p657 = pneg %p282
        %p658 = pneg %p279
        %p659 = pneg %p303
        %p660 = pneg %p300
        %p661 = pneg %p324
        %p662 = pneg %p321
        %p663 = pneg %p345
        %p664 = pneg %p342
        %p665 = pneg %p366
        %p666 = pneg %p363
        %p667 = pneg %p387
        %p668 = pneg %p384
        %p669 = pneg %p408
        %p670 = pneg %p405
        %p671 = pneg %p429
        %p672 = pneg %p426
        %p673 = pneg %p450
        %p674 = pneg %p447
        %p675 = pneg %p471
        %p676 = pneg %p468
        %p677 = pneg %p492
        %p678 = pneg %p489
        %p679 = pneg %p518
        %p680 = pneg %p515
        %s681 = sand.u32 %s505, 1
        %s682 = scalar_lea.sflag [#allocation6], %s681
        %s683 = sand.u32 %s505, 1
        %s684 = scalar_lea.vmem [#allocation5], %s683
        %p685 = scmp.lt.s32.totalorder %s41, 1
        %s686 = scalar_select %p685, %s41, 1
        %s687 = smul.addr %s686, 2
        %s688 = smul.addr %s687, 4
        %s689 = scalar_lea.vmem %s0, %s688
        %p690 = scmp.lt.s32.totalorder %s41, 1
        %s691 = scalar_select %p690, %s41, 1
        %s692 = smul.addr %s691, 2
        %s693 = smul.addr %s692, 8
        %s694 = scalar_lea.vmem %s1, %s693
        %p695 = scmp.lt.s32.totalorder %s41, 1
        %s696 = scalar_select %p695, %s41, 1
        %s697 = smul.addr %s696, 2
        %s698 = smul.addr %s697, 8
        %s699 = scalar_lea.vmem %s2, %s698
        %v700 = vld [vmem:[%s689] sm:$0xf]
        %v701 = vld [vmem:[%s689 + $0x4] sm:$0xf]
        %v702 = vunpack.c.l.bf16 %v700
        %v703 = vunpack.c.l.bf16 %v701
        %v704 = vld [vmem:[%s694] sm:$0xff]
        %v705 = vld [vmem:[%s694 + $0x8] sm:$0xff]
        %v706 = vld [vmem:[%s699] sm:$0xff]
        %v707 = vld [vmem:[%s699 + $0x8] sm:$0xff]
        %v708 = vlaneseq
        %v709 = vshrl.u32 %v708, 7
        %v710 = vadd.s32 %v709, 8
        %v711 = vlaneseq
        %v712 = vand.u32 %v711, 127
        %vm713 = vcmp.eq.s32.totalorder %v709, %v712
        %vm714 = vcmp.eq.s32.totalorder %v710, %v712
        %v715 = vsel %vm713, 1, 0
        %v716 = vsel %vm714, 1, 0
        %v717 = vcvt.s32.f32 %v715
        %v718 = vcvt.s32.f32 %v716
        %719 = vxpose.xlu0.b32.start [1/16] %v704, 128
        %720 = vxpose.xlu0.b32.cont [2/16] %v705, 128
        %721 = vxpose.xlu0.b32.cont [3/16] 0.0, 128
        %722 = vxpose.xlu0.b32.cont [4/16] 0.0, 128
        %723 = vxpose.xlu0.b32.cont [5/16] 0.0, 128
        %724 = vxpose.xlu0.b32.cont [6/16] 0.0, 128
        %725 = vxpose.xlu0.b32.cont [7/16] 0.0, 128
        %726 = vxpose.xlu0.b32.cont [8/16] 0.0, 128
        %727 = vxpose.xlu0.b32.cont [9/16] 0.0, 128
        %728 = vxpose.xlu0.b32.cont [10/16] 0.0, 128
        %729 = vxpose.xlu0.b32.cont [11/16] 0.0, 128
        %730 = vxpose.xlu0.b32.cont [12/16] 0.0, 128
        %731 = vxpose.xlu0.b32.cont [13/16] 0.0, 128
        %732 = vxpose.xlu0.b32.cont [14/16] 0.0, 128
        %733 = vxpose.xlu0.b32.cont [15/16] 0.0, 128
        %734 = vxpose.xlu0.b32.end [16/16] 0.0, 128
        %v735 = vpop.trf.xlu0
        %v736 = vpop.trf.xlu0
        %v737 = vpop.trf.xlu0
        %v738 = vpop.trf.xlu0
        %v739 = vpop.trf.xlu0
        %v740 = vpop.trf.xlu0
        %v741 = vpop.trf.xlu0
        %v742 = vpop.trf.xlu0
        %v743 = vpop.trf.xlu0
        %v744 = vpop.trf.xlu0
        %v745 = vpop.trf.xlu0
        %v746 = vpop.trf.xlu0
        %v747 = vpop.trf.xlu0
        %v748 = vpop.trf.xlu0
        %v749 = vpop.trf.xlu0
        %v750 = vpop.trf.xlu0
        %752 = vset.pattern.permute.xlu0 0
        %753 = vperm.xlu0 %752, %v704
        %v754 = vpop.permute.xlu0 %753
        %757 = vset.pattern.permute.xlu0 0
        %758 = vperm.xlu0 %757, %v705
        %v759 = vpop.permute.xlu0 %758
        %v761 = vmul.f32 %v702, %v754
        %v762 = vmul.f32 %v703, %v759
        %v763 = vperm.slane %v735, 0
        %v764 = vmul.f32 %v761, %v763
        %v765 = vmul.f32 %v762, %v763
        %v766 = vmul.f32 %v717, %v754
        %v767 = vmul.f32 %v718, %v759
        %v768 = vadd.f32 %v764, %v766
        %v769 = vadd.f32 %v765, %v767
        %vm770 = vcmask 130048
        %v771 = vsel %vm770, %v768, 0.0
        %772 = vadd.xlane.f32.xlu0 %v771
        %v773 = vpop.xlane.xlu0 %772
        %v774 = vsel %vm770, %v769, 0.0
        %775 = vadd.xlane.f32.xlu0 %v774
        %v776 = vpop.xlane.xlu0 %775
        %vm777 = vcmp.gt.f32.partialorder %v773, 0.0
        %vm778 = vcmp.gt.f32.partialorder %v776, 0.0
        %v779 = vmax.f32 %v773, 1e-12
        %v780 = vmax.f32 %v776, 1e-12
        %v781 = vrsqrt.pop %v779
        %v782 = vmul.f32 %v781, %v779
        %v783 = vmul.f32 %v782, %v781
        %v784 = vmul.f32 0.5, %v783
        %v785 = vsub.f32 1.5, %v784
        %v786 = vmul.f32 %v781, %v785
        %vm787 = vweird.f32 %v779
        %vm788 = vweird.f32 %v781
        %vm789 = vmor %vm787, %vm788
        %v790 = vsel %vm789, %v781, %v786
        %v791 = vrsqrt.pop %v780
        %v792 = vmul.f32 %v791, %v780
        %v793 = vmul.f32 %v792, %v791
        %v794 = vmul.f32 0.5, %v793
        %v795 = vsub.f32 1.5, %v794
        %v796 = vmul.f32 %v791, %v795
        %vm797 = vweird.f32 %v780
        %vm798 = vweird.f32 %v791
        %vm799 = vmor %vm797, %vm798
        %v800 = vsel %vm799, %v791, %v796
        %v801 = vsel %vm777, %v790, 0.0
        %v802 = vsel %vm778, %v800, 0.0
        %v803 = vmul.f32 %v768, %v801
        %v804 = vmul.f32 %v769, %v802
        %805 = vxpose.xlu0.b32.start [1/16] %v801, 128
        %806 = vxpose.xlu0.b32.cont [2/16] %v802, 128
        %807 = vxpose.xlu0.b32.cont [3/16] 0.0, 128
        %808 = vxpose.xlu0.b32.cont [4/16] 0.0, 128
        %809 = vxpose.xlu0.b32.cont [5/16] 0.0, 128
        %810 = vxpose.xlu0.b32.cont [6/16] 0.0, 128
        %811 = vxpose.xlu0.b32.cont [7/16] 0.0, 128
        %812 = vxpose.xlu0.b32.cont [8/16] 0.0, 128
        %813 = vxpose.xlu0.b32.cont [9/16] 0.0, 128
        %814 = vxpose.xlu0.b32.cont [10/16] 0.0, 128
        %815 = vxpose.xlu0.b32.cont [11/16] 0.0, 128
        %816 = vxpose.xlu0.b32.cont [12/16] 0.0, 128
        %817 = vxpose.xlu0.b32.cont [13/16] 0.0, 128
        %818 = vxpose.xlu0.b32.cont [14/16] 0.0, 128
        %819 = vxpose.xlu0.b32.cont [15/16] 0.0, 128
        %820 = vxpose.xlu0.b32.end [16/16] 0.0, 128
        %v821 = vpop.trf.xlu0
        %v822 = vpop.trf.xlu0
        %v823 = vpop.trf.xlu0
        %v824 = vpop.trf.xlu0
        %v825 = vpop.trf.xlu0
        %v826 = vpop.trf.xlu0
        %v827 = vpop.trf.xlu0
        %v828 = vpop.trf.xlu0
        %v829 = vpop.trf.xlu0
        %v830 = vpop.trf.xlu0
        %v831 = vpop.trf.xlu0
        %v832 = vpop.trf.xlu0
        %v833 = vpop.trf.xlu0
        %v834 = vpop.trf.xlu0
        %v835 = vpop.trf.xlu0
        %v836 = vpop.trf.xlu0
        %v837 = vperm.slane %v821, 0
        %v838 = vmul.f32 %v803, %v837
        %v839 = vmul.f32 %v804, %v837
        %v840 = vld [vmem:[%s3] sm:$0xff]
        %vm841 = vcmask 64512
        %v843 = vsel %vm841, %v706, 0
        %v846 = vsel %vm841, %v707, 0
        %848 = vmatpush.msra.mxu0 0.0
        %849 = vmatpush.msra.mxu0 0.0
        %850 = vmatpush.msra.mxu0 0.0
        %851 = vmatpush.msra.mxu0 0.0
        %852 = vmatpush.msra.mxu0 0.0
        %853 = vmatpush.msra.mxu0 0.0
        %854 = vmatpush.msra.mxu0 0.0
        %855 = vmatpush.msra.mxu0 0.0
        %856 = vmatpush.msra.mxu0 0.0
        %857 = vmatpush.msra.mxu0 0.0
        %858 = vmatpush.msra.mxu0 0.0
        %859 = vmatpush.msra.mxu0 0.0
        %860 = vmatpush.msra.mxu0 0.0
        %861 = vmatpush.msra.mxu0 0.0
        %862 = vmatpush.msra.mxu0 0.0
        %863 = vmatpush.msra.mxu0 %v840
        %864 = vmatmul.f32.gmra.mxu0 %v843
        %v865 = vpop.f32.mrf.mxu0
        %v866 = vadd.f32 0.0, %v865
        %867 = vmatmul.f32.gmra.mxu0 %v846
        %v868 = vpop.f32.mrf.mxu0
        %v869 = vadd.f32 0.0, %v868
        %870 = vdwg.mxu0
        %v871 = vld [vmem:[%s4] sm:$0x1]
        %v873 = vperm.slane %v871, 0
        %v876 = vsel %vm770, %v838, 0
        %v879 = vsel %vm770, %v839, 0
        %881 = vmatpush.msra.mxu0 0.0
        %882 = vmatpush.msra.mxu0 0.0
        %883 = vmatpush.msra.mxu0 0.0
        %884 = vmatpush.msra.mxu0 0.0
        %885 = vmatpush.msra.mxu0 0.0
        %886 = vmatpush.msra.mxu0 0.0
        %887 = vmatpush.msra.mxu0 0.0
        %888 = vmatpush.msra.mxu0 0.0
        %889 = vmatpush.msra.mxu0 0.0
        %890 = vmatpush.msra.mxu0 0.0
        %891 = vmatpush.msra.mxu0 0.0
        %892 = vmatpush.msra.mxu0 0.0
        %893 = vmatpush.msra.mxu0 0.0
        %894 = vmatpush.msra.mxu0 0.0
        %895 = vmatpush.msra.mxu0 %v869
        %896 = vmatpush.msra.mxu0 %v866
        %897 = vmatmul.f32.gmra.mxu0 %v876
        %v898 = vpop.f32.mrf.mxu0
        %v899 = vadd.f32 %v873, %v898
        %900 = vmatmul.f32.gmra.mxu0 %v879
        %v901 = vpop.f32.mrf.mxu0
        %v902 = vadd.f32 %v873, %v901
        %903 = vdwg.mxu0
        %v904 = vmax.f32 %v899, 0.0
        %v905 = vmax.f32 %v902, 0.0
        %v906 = vmul.f32 %v904, %v754
        %v907 = vmul.f32 %v905, %v759
        %v908 = vld [vmem:[%s5] sm:$0xff]
        %v909 = vld [vmem:[%s5 + $0x8] sm:$0xff]
        %v910 = vld [vmem:[%s5 + $0x10] sm:$0xff]
        %v911 = vld [vmem:[%s5 + $0x18] sm:$0xff]
        %vm912 = vcmask 261120
        %v914 = vsel %vm912, %v906, 0
        %v917 = vsel %vm912, %v907, 0
        %919 = vmatpush.msra.mxu0 0.0
        %920 = vmatpush.msra.mxu0 0.0
        %921 = vmatpush.msra.mxu0 0.0
        %922 = vmatpush.msra.mxu0 0.0
        %923 = vmatpush.msra.mxu0 0.0
        %924 = vmatpush.msra.mxu0 0.0
        %925 = vmatpush.msra.mxu0 0.0
        %926 = vmatpush.msra.mxu0 0.0
        %927 = vmatpush.msra.mxu0 0.0
        %928 = vmatpush.msra.mxu0 0.0
        %929 = vmatpush.msra.mxu0 0.0
        %930 = vmatpush.msra.mxu0 0.0
        %931 = vmatpush.msra.mxu0 %v911
        %932 = vmatpush.msra.mxu0 %v910
        %933 = vmatpush.msra.mxu0 %v909
        %934 = vmatpush.msra.mxu0 %v908
        %935 = vmatmul.f32.gmra.mxu0 %v914
        %v936 = vpop.f32.mrf.mxu0
        %v937 = vadd.f32 0.0, %v936
        %938 = vmatmul.f32.gmra.mxu0 %v917
        %v939 = vpop.f32.mrf.mxu0
        %v940 = vadd.f32 0.0, %v939
        %941 = vdwg.mxu0
        %v942 = vld [vmem:[#allocation2] sm:$0x1]
        %v944 = vperm.slane %v942, 0
        %946 = vmatpush.msra.mxu0 0.0
        %947 = vmatpush.msra.mxu0 0.0
        %948 = vmatpush.msra.mxu0 0.0
        %949 = vmatpush.msra.mxu0 0.0
        %950 = vmatpush.msra.mxu0 0.0
        %951 = vmatpush.msra.mxu0 0.0
        %952 = vmatpush.msra.mxu0 0.0
        %953 = vmatpush.msra.mxu0 0.0
        %954 = vmatpush.msra.mxu0 0.0
        %955 = vmatpush.msra.mxu0 0.0
        %956 = vmatpush.msra.mxu0 0.0
        %957 = vmatpush.msra.mxu0 0.0
        %958 = vmatpush.msra.mxu0 0.0
        %959 = vmatpush.msra.mxu0 0.0
        %960 = vmatpush.msra.mxu0 %v940
        %961 = vmatpush.msra.mxu0 %v937
        %962 = vmatmul.f32.gmra.mxu0 %v876
        %v963 = vpop.f32.mrf.mxu0
        %v964 = vadd.f32 %v944, %v963
        %965 = vmatmul.f32.gmra.mxu0 %v879
        %v966 = vpop.f32.mrf.mxu0
        %v967 = vadd.f32 %v944, %v966
        %968 = vdwg.mxu0
        %969 = vxpose.xlu0.b32.start [1/16] %v964, 128
        %970 = vxpose.xlu0.b32.cont [2/16] %v967, 128
        %971 = vxpose.xlu0.b32.cont [3/16] 0.0, 128
        %972 = vxpose.xlu0.b32.cont [4/16] 0.0, 128
        %973 = vxpose.xlu0.b32.cont [5/16] 0.0, 128
        %974 = vxpose.xlu0.b32.cont [6/16] 0.0, 128
        %975 = vxpose.xlu0.b32.cont [7/16] 0.0, 128
        %976 = vxpose.xlu0.b32.cont [8/16] 0.0, 128
        %977 = vxpose.xlu0.b32.cont [9/16] 0.0, 128
        %978 = vxpose.xlu0.b32.cont [10/16] 0.0, 128
        %979 = vxpose.xlu0.b32.cont [11/16] 0.0, 128
        %980 = vxpose.xlu0.b32.cont [12/16] 0.0, 128
        %981 = vxpose.xlu0.b32.cont [13/16] 0.0, 128
        %982 = vxpose.xlu0.b32.cont [14/16] 0.0, 128
        %983 = vxpose.xlu0.b32.cont [15/16] 0.0, 128
        %984 = vxpose.xlu0.b32.end [16/16] 0.0, 128
        %v985 = vpop.trf.xlu0
        %v986 = vpop.trf.xlu0
        %v987 = vpop.trf.xlu0
        %v988 = vpop.trf.xlu0
        %v989 = vpop.trf.xlu0
        %v990 = vpop.trf.xlu0
        %v991 = vpop.trf.xlu0
        %v992 = vpop.trf.xlu0
        %v993 = vpop.trf.xlu0
        %v994 = vpop.trf.xlu0
        %v995 = vpop.trf.xlu0
        %v996 = vpop.trf.xlu0
        %v997 = vpop.trf.xlu0
        %v998 = vpop.trf.xlu0
        %v999 = vpop.trf.xlu0
        %v1000 = vpop.trf.xlu0
        %v1001 = vperm.slane %v985, 0
        %1003 = vset.pattern.permute.xlu0 0
        %1004 = vperm.xlu0 %1003, %v964
        %v1005 = vpop.permute.xlu0 %1004
        %1008 = vset.pattern.permute.xlu0 0
        %1009 = vperm.xlu0 %1008, %v967
        %v1010 = vpop.permute.xlu0 %1009
        %vm1012 = vcmp.gt.f32.partialorder %v1001, %v1005
        %vm1013 = vcmp.gt.f32.partialorder %v1001, %v1010
        %vm1014 = vcmp.eq.f32.partialorder %v1001, %v1005
        %vm1015 = vcmp.eq.f32.partialorder %v1001, %v1010
        %vm1016 = vcmp.lt.s32.totalorder %v712, %v709
        %vm1017 = vcmp.lt.s32.totalorder %v712, %v710
        %vm1018 = vmand %vm1014, %vm1016
        %vm1019 = vmand %vm1015, %vm1017
        %vm1020 = vmor %vm1012, %vm1018
        %vm1021 = vmor %vm1013, %vm1019
        %v1022 = vsel %vm1020, 1, 0
        %v1023 = vsel %vm1021, 1, 0
        %v1024 = vcvt.s32.f32 %v1022
        %v1025 = vcvt.s32.f32 %v1023
        %v1026 = vmul.f32 %v1024, %v763
        %v1027 = vmul.f32 %v1025, %v763
        %v1028 = vsel %vm770, %v1026, 0.0
        %1029 = vadd.xlane.f32.xlu0 %v1028
        %v1030 = vpop.xlane.xlu0 %1029
        %v1031 = vsel %vm770, %v1027, 0.0
        %1032 = vadd.xlane.f32.xlu0 %v1031
        %v1033 = vpop.xlane.xlu0 %1032
        %vm1034 = vcmask 7168
        %v1035 = vsel %vm1034, %v704, 0.0
        %v1036 = vsel %vm1034, %v705, 0.0
        %v1037 = vadd.f32 %v1035, %v1036
        %v1038 = vrot.slane %v1037, 4
        %v1039 = vadd.f32 %v1037, %v1038
        %v1040 = vrot.slane %v1039, 2
        %v1041 = vadd.f32 %v1039, %v1040
        %v1042 = vrot.slane %v1041, 1
        %v1043 = vadd.f32 %v1041, %v1042
        %v1044 = vmul.f32 %v1043, 0.5
        %v1045 = vceil.f32 %v1044
        %vm1046 = vcmp.lt.f32.partialorder %v1030, %v1045
        %vm1047 = vcmp.lt.f32.partialorder %v1033, %v1045
        %vm1048 = vcmp.gt.f32.partialorder %v704, 0.0
        %vm1049 = vcmp.gt.f32.partialorder %v705, 0.0
        %vm1050 = vmand %vm1046, %vm1048
        %vm1051 = vmand %vm1047, %vm1049
        %v1052 = vsel %vm1050, 1.0, 0.0
        %v1053 = vsel %vm1051, 1.0, 0.0
        %v1054 = vtanh.pop %v964
        %v1055 = vtanh.pop %v967
        %1057 = vset.pattern.permute.xlu0 0
        %1058 = vperm.xlu0 %1057, %v1054
        %v1059 = vpop.permute.xlu0 %1058
        %1062 = vset.pattern.permute.xlu0 0
        %1063 = vperm.xlu0 %1062, %v1055
        %v1064 = vpop.permute.xlu0 %1063
        %v1066 = vmul.f32 %v906, %v1059
        %v1067 = vmul.f32 %v907, %v1064
        %1069 = vset.pattern.permute.xlu0 0
        %1070 = vperm.xlu0 %1069, %v1052
        %v1071 = vpop.permute.xlu0 %1070
        %1074 = vset.pattern.permute.xlu0 0
        %1075 = vperm.xlu0 %1074, %v1053
        %v1076 = vpop.permute.xlu0 %1075
        %v1078 = vmul.f32 %v1066, %v1071
        %v1079 = vmul.f32 %v1067, %v1076
        %vm1080 = vcmp.gt.f32.partialorder %v1052, 0.0
        %vm1081 = vcmp.gt.f32.partialorder %v1053, 0.0
        %v1082 = vsel %vm1080, 1, 0
        %v1083 = vsel %vm1081, 1, 0
        %1084 = vset.pattern.permute.xlu0 0
        %1085 = vperm.xlu0 %1084, %v1082
        %v1086 = vpop.permute.xlu0 %1085
        %1087 = vset.pattern.permute.xlu0 0
        %1088 = vperm.xlu0 %1087, %v1083
        %v1089 = vpop.permute.xlu0 %1088
        %vm1090 = vcmp.eq.s32.totalorder %v1086, 1
        %vm1091 = vcmp.eq.s32.totalorder %v1089, 1
        %v1092 = vsel %vm1090, %v1078, -1e+30
        %v1093 = vsel %vm1091, %v1079, -1e+30
        %v1094 = vsel %vm912, %v1092, -inf
        %v1095 = vsel %vm912, %v1093, -inf
        %v1096 = vmax.f32 %v1094, %v1095
        %v1097 = vrot.slane %v1096, 4
        %v1098 = vmax.f32 %v1096, %v1097
        %v1099 = vrot.slane %v1098, 2
        %v1100 = vmax.f32 %v1098, %v1099
        %v1101 = vrot.slane %v1100, 1
        %v1102 = vmax.f32 %v1100, %v1101
        %v1103 = vsel %vm1034, %v1052, 0.0
        %v1104 = vsel %vm1034, %v1053, 0.0
        %v1105 = vadd.f32 %v1103, %v1104
        %v1106 = vrot.slane %v1105, 4
        %v1107 = vadd.f32 %v1105, %v1106
        %v1108 = vrot.slane %v1107, 2
        %v1109 = vadd.f32 %v1107, %v1108
        %v1110 = vrot.slane %v1109, 1
        %v1111 = vadd.f32 %v1109, %v1110
        %v1112 = vmax.f32 %v1111, 1.0
        %v1113 = vrcp.pop %v1112
        %v1114 = vsel %vm912, %v1078, 0.0
        %v1115 = vsel %vm912, %v1079, 0.0
        %v1116 = vadd.f32 %v1114, %v1115
        %v1117 = vrot.slane %v1116, 4
        %v1118 = vadd.f32 %v1116, %v1117
        %v1119 = vrot.slane %v1118, 2
        %v1120 = vadd.f32 %v1118, %v1119
        %v1121 = vrot.slane %v1120, 1
        %v1122 = vadd.f32 %v1120, %v1121
        %1124 = vset.pattern.permute.xlu0 0
        %1125 = vperm.xlu0 %1124, %v1113
        %v1126 = vpop.permute.xlu0 %1125
        %v1128 = vmul.f32 %v1122, %v1126
        %vm1129 = vcmp.gt.f32.partialorder %v1111, 0.0
        %v1130 = vsel %vm1129, 1.0, 0.0
        %1132 = vset.pattern.permute.xlu0 0
        %1133 = vperm.xlu0 %1132, %v1130
        %v1134 = vpop.permute.xlu0 %1133
        %v1136 = vmul.f32 %v1102, %v1134
        %v1137 = vmul.f32 %v1128, %v1134
        %1138 = vxpose.xlu0.b32.start [1/16] %v1052, 128
        %1139 = vxpose.xlu0.b32.cont [2/16] %v1053, 128
        %1140 = vxpose.xlu0.b32.cont [3/16] 0.0, 128
        %1141 = vxpose.xlu0.b32.cont [4/16] 0.0, 128
        %1142 = vxpose.xlu0.b32.cont [5/16] 0.0, 128
        %1143 = vxpose.xlu0.b32.cont [6/16] 0.0, 128
        %1144 = vxpose.xlu0.b32.cont [7/16] 0.0, 128
        %1145 = vxpose.xlu0.b32.cont [8/16] 0.0, 128
        %1146 = vxpose.xlu0.b32.cont [9/16] 0.0, 128
        %1147 = vxpose.xlu0.b32.cont [10/16] 0.0, 128
        %1148 = vxpose.xlu0.b32.cont [11/16] 0.0, 128
        %1149 = vxpose.xlu0.b32.cont [12/16] 0.0, 128
        %1150 = vxpose.xlu0.b32.cont [13/16] 0.0, 128
        %1151 = vxpose.xlu0.b32.cont [14/16] 0.0, 128
        %1152 = vxpose.xlu0.b32.cont [15/16] 0.0, 128
        %1153 = vxpose.xlu0.b32.end [16/16] 0.0, 128
        %v1154 = vpop.trf.xlu0
        %v1155 = vpop.trf.xlu0
        %v1156 = vpop.trf.xlu0
        %v1157 = vpop.trf.xlu0
        %v1158 = vpop.trf.xlu0
        %v1159 = vpop.trf.xlu0
        %v1160 = vpop.trf.xlu0
        %v1161 = vpop.trf.xlu0
        %v1162 = vpop.trf.xlu0
        %v1163 = vpop.trf.xlu0
        %v1164 = vpop.trf.xlu0
        %v1165 = vpop.trf.xlu0
        %v1166 = vpop.trf.xlu0
        %v1167 = vpop.trf.xlu0
        %v1168 = vpop.trf.xlu0
        %v1169 = vpop.trf.xlu0
        %v1170 = vmul.f32 %v702, %v1071
        %v1171 = vmul.f32 %v703, %v1076
        %v1172 = vperm.slane %v1154, 0
        %v1173 = vmul.f32 %v1170, %v1172
        %v1174 = vmul.f32 %v1171, %v1172
        %v1175 = vmul.f32 %v717, %v1071
        %v1176 = vmul.f32 %v718, %v1076
        %v1177 = vadd.f32 %v1173, %v1175
        %v1178 = vadd.f32 %v1174, %v1176
        %v1179 = vsel %vm770, %v1177, 0.0
        %1180 = vadd.xlane.f32.xlu0 %v1179
        %v1181 = vpop.xlane.xlu0 %1180
        %v1182 = vsel %vm770, %v1178, 0.0
        %1183 = vadd.xlane.f32.xlu0 %v1182
        %v1184 = vpop.xlane.xlu0 %1183
        %vm1185 = vcmp.gt.f32.partialorder %v1181, 0.0
        %vm1186 = vcmp.gt.f32.partialorder %v1184, 0.0
        %v1187 = vmax.f32 %v1181, 1e-12
        %v1188 = vmax.f32 %v1184, 1e-12
        %v1189 = vrsqrt.pop %v1187
        %v1190 = vmul.f32 %v1189, %v1187
        %v1191 = vmul.f32 %v1190, %v1189
        %v1192 = vmul.f32 0.5, %v1191
        %v1193 = vsub.f32 1.5, %v1192
        %v1194 = vmul.f32 %v1189, %v1193
        %vm1195 = vweird.f32 %v1187
        %vm1196 = vweird.f32 %v1189
        %vm1197 = vmor %vm1195, %vm1196
        %v1198 = vsel %vm1197, %v1189, %v1194
        %v1199 = vrsqrt.pop %v1188
        %v1200 = vmul.f32 %v1199, %v1188
        %v1201 = vmul.f32 %v1200, %v1199
        %v1202 = vmul.f32 0.5, %v1201
        %v1203 = vsub.f32 1.5, %v1202
        %v1204 = vmul.f32 %v1199, %v1203
        %vm1205 = vweird.f32 %v1188
        %vm1206 = vweird.f32 %v1199
        %vm1207 = vmor %vm1205, %vm1206
        %v1208 = vsel %vm1207, %v1199, %v1204
        %v1209 = vsel %vm1185, %v1198, 0.0
        %v1210 = vsel %vm1186, %v1208, 0.0
        %v1211 = vmul.f32 %v1177, %v1209
        %v1212 = vmul.f32 %v1178, %v1210
        %1213 = vxpose.xlu0.b32.start [1/16] %v1209, 128
        %1214 = vxpose.xlu0.b32.cont [2/16] %v1210, 128
        %1215 = vxpose.xlu0.b32.cont [3/16] 0.0, 128
        %1216 = vxpose.xlu0.b32.cont [4/16] 0.0, 128
        %1217 = vxpose.xlu0.b32.cont [5/16] 0.0, 128
        %1218 = vxpose.xlu0.b32.cont [6/16] 0.0, 128
        %1219 = vxpose.xlu0.b32.cont [7/16] 0.0, 128
        %1220 = vxpose.xlu0.b32.cont [8/16] 0.0, 128
        %1221 = vxpose.xlu0.b32.cont [9/16] 0.0, 128
        %1222 = vxpose.xlu0.b32.cont [10/16] 0.0, 128
        %1223 = vxpose.xlu0.b32.cont [11/16] 0.0, 128
        %1224 = vxpose.xlu0.b32.cont [12/16] 0.0, 128
        %1225 = vxpose.xlu0.b32.cont [13/16] 0.0, 128
        %1226 = vxpose.xlu0.b32.cont [14/16] 0.0, 128
        %1227 = vxpose.xlu0.b32.cont [15/16] 0.0, 128
        %1228 = vxpose.xlu0.b32.end [16/16] 0.0, 128
        %v1229 = vpop.trf.xlu0
        %v1230 = vpop.trf.xlu0
        %v1231 = vpop.trf.xlu0
        %v1232 = vpop.trf.xlu0
        %v1233 = vpop.trf.xlu0
        %v1234 = vpop.trf.xlu0
        %v1235 = vpop.trf.xlu0
        %v1236 = vpop.trf.xlu0
        %v1237 = vpop.trf.xlu0
        %v1238 = vpop.trf.xlu0
        %v1239 = vpop.trf.xlu0
        %v1240 = vpop.trf.xlu0
        %v1241 = vpop.trf.xlu0
        %v1242 = vpop.trf.xlu0
        %v1243 = vpop.trf.xlu0
        %v1244 = vpop.trf.xlu0
        %v1245 = vperm.slane %v1229, 0
        %v1246 = vmul.f32 %v1211, %v1245
        %v1247 = vmul.f32 %v1212, %v1245
        %v1248 = vld [vmem:[%s7] sm:$0xff]
        %v1249 = vld [vmem:[%s7 + $0x8] sm:$0xff]
        %v1250 = vld [vmem:[%s7 + $0x10] sm:$0xff]
        %v1251 = vld [vmem:[%s7 + $0x18] sm:$0xff]
        %v1253 = vsel %vm912, %v1078, 0
        %v1256 = vsel %vm912, %v1079, 0
        %1258 = vmatpush.msra.mxu0 0.0
        %1259 = vmatpush.msra.mxu0 0.0
        %1260 = vmatpush.msra.mxu0 0.0
        %1261 = vmatpush.msra.mxu0 0.0
        %1262 = vmatpush.msra.mxu0 0.0
        %1263 = vmatpush.msra.mxu0 0.0
        %1264 = vmatpush.msra.mxu0 0.0
        %1265 = vmatpush.msra.mxu0 0.0
        %1266 = vmatpush.msra.mxu0 0.0
        %1267 = vmatpush.msra.mxu0 0.0
        %1268 = vmatpush.msra.mxu0 0.0
        %1269 = vmatpush.msra.mxu0 0.0
        %1270 = vmatpush.msra.mxu0 %v1251
        %1271 = vmatpush.msra.mxu0 %v1250
        %1272 = vmatpush.msra.mxu0 %v1249
        %1273 = vmatpush.msra.mxu0 %v1248
        %1274 = vmatmul.f32.gmra.mxu0 %v1253
        %v1275 = vpop.f32.mrf.mxu0
        %v1276 = vadd.f32 0.0, %v1275
        %1277 = vmatmul.f32.gmra.mxu0 %v1256
        %v1278 = vpop.f32.mrf.mxu0
        %v1279 = vadd.f32 0.0, %v1278
        %1280 = vdwg.mxu0
        %v1281 = vld [vmem:[%s8] sm:$0x1]
        %v1283 = vperm.slane %v1281, 0
        %v1286 = vsel %vm770, %v1246, 0
        %v1289 = vsel %vm770, %v1247, 0
        %1291 = vmatpush.msra.mxu0 0.0
        %1292 = vmatpush.msra.mxu0 0.0
        %1293 = vmatpush.msra.mxu0 0.0
        %1294 = vmatpush.msra.mxu0 0.0
        %1295 = vmatpush.msra.mxu0 0.0
        %1296 = vmatpush.msra.mxu0 0.0
        %1297 = vmatpush.msra.mxu0 0.0
        %1298 = vmatpush.msra.mxu0 0.0
        %1299 = vmatpush.msra.mxu0 0.0
        %1300 = vmatpush.msra.mxu0 0.0
        %1301 = vmatpush.msra.mxu0 0.0
        %1302 = vmatpush.msra.mxu0 0.0
        %1303 = vmatpush.msra.mxu0 0.0
        %1304 = vmatpush.msra.mxu0 0.0
        %1305 = vmatpush.msra.mxu0 %v1279
        %1306 = vmatpush.msra.mxu0 %v1276
        %1307 = vmatmul.f32.gmra.mxu0 %v1286
        %v1308 = vpop.f32.mrf.mxu0
        %v1309 = vadd.f32 %v1283, %v1308
        %1310 = vmatmul.f32.gmra.mxu0 %v1289
        %v1311 = vpop.f32.mrf.mxu0
        %v1312 = vadd.f32 %v1283, %v1311
        %1313 = vdwg.mxu0
        %v1314 = vmax.f32 %v1309, 0.0
        %v1315 = vmax.f32 %v1312, 0.0
        %v1316 = vmul.f32 %v1314, %v1071
        %v1317 = vmul.f32 %v1315, %v1076
        %v1318 = vld [vmem:[%s9] sm:$0xff]
        %v1319 = vld [vmem:[%s9 + $0x8] sm:$0xff]
        %v1320 = vld [vmem:[%s9 + $0x10] sm:$0xff]
        %v1321 = vld [vmem:[%s9 + $0x18] sm:$0xff]
        %v1323 = vsel %vm912, %v1316, 0
        %v1326 = vsel %vm912, %v1317, 0
        %1328 = vmatpush.msra.mxu0 0.0
        %1329 = vmatpush.msra.mxu0 0.0
        %1330 = vmatpush.msra.mxu0 0.0
        %1331 = vmatpush.msra.mxu0 0.0
        %1332 = vmatpush.msra.mxu0 0.0
        %1333 = vmatpush.msra.mxu0 0.0
        %1334 = vmatpush.msra.mxu0 0.0
        %1335 = vmatpush.msra.mxu0 0.0
        %1336 = vmatpush.msra.mxu0 0.0
        %1337 = vmatpush.msra.mxu0 0.0
        %1338 = vmatpush.msra.mxu0 0.0
        %1339 = vmatpush.msra.mxu0 0.0
        %1340 = vmatpush.msra.mxu0 %v1321
        %1341 = vmatpush.msra.mxu0 %v1320
        %1342 = vmatpush.msra.mxu0 %v1319
        %1343 = vmatpush.msra.mxu0 %v1318
        %1344 = vmatmul.f32.gmra.mxu0 %v1323
        %v1345 = vpop.f32.mrf.mxu0
        %v1346 = vadd.f32 0.0, %v1345
        %1347 = vmatmul.f32.gmra.mxu0 %v1326
        %v1348 = vpop.f32.mrf.mxu0
        %v1349 = vadd.f32 0.0, %v1348
        %1350 = vdwg.mxu0
        %v1351 = vld [vmem:[#allocation3] sm:$0x1]
        %v1353 = vperm.slane %v1351, 0
        %1355 = vmatpush.msra.mxu0 0.0
        %1356 = vmatpush.msra.mxu0 0.0
        %1357 = vmatpush.msra.mxu0 0.0
        %1358 = vmatpush.msra.mxu0 0.0
        %1359 = vmatpush.msra.mxu0 0.0
        %1360 = vmatpush.msra.mxu0 0.0
        %1361 = vmatpush.msra.mxu0 0.0
        %1362 = vmatpush.msra.mxu0 0.0
        %1363 = vmatpush.msra.mxu0 0.0
        %1364 = vmatpush.msra.mxu0 0.0
        %1365 = vmatpush.msra.mxu0 0.0
        %1366 = vmatpush.msra.mxu0 0.0
        %1367 = vmatpush.msra.mxu0 0.0
        %1368 = vmatpush.msra.mxu0 0.0
        %1369 = vmatpush.msra.mxu0 %v1349
        %1370 = vmatpush.msra.mxu0 %v1346
        %1371 = vmatmul.f32.gmra.mxu0 %v1286
        %v1372 = vpop.f32.mrf.mxu0
        %v1373 = vadd.f32 %v1353, %v1372
        %1374 = vmatmul.f32.gmra.mxu0 %v1289
        %v1375 = vpop.f32.mrf.mxu0
        %v1376 = vadd.f32 %v1353, %v1375
        %1377 = vdwg.mxu0
        %1378 = vxpose.xlu0.b32.start [1/16] %v1373, 128
        %1379 = vxpose.xlu0.b32.cont [2/16] %v1376, 128
        %1380 = vxpose.xlu0.b32.cont [3/16] 0.0, 128
        %1381 = vxpose.xlu0.b32.cont [4/16] 0.0, 128
        %1382 = vxpose.xlu0.b32.cont [5/16] 0.0, 128
        %1383 = vxpose.xlu0.b32.cont [6/16] 0.0, 128
        %1384 = vxpose.xlu0.b32.cont [7/16] 0.0, 128
        %1385 = vxpose.xlu0.b32.cont [8/16] 0.0, 128
        %1386 = vxpose.xlu0.b32.cont [9/16] 0.0, 128
        %1387 = vxpose.xlu0.b32.cont [10/16] 0.0, 128
        %1388 = vxpose.xlu0.b32.cont [11/16] 0.0, 128
        %1389 = vxpose.xlu0.b32.cont [12/16] 0.0, 128
        %1390 = vxpose.xlu0.b32.cont [13/16] 0.0, 128
        %1391 = vxpose.xlu0.b32.cont [14/16] 0.0, 128
        %1392 = vxpose.xlu0.b32.cont [15/16] 0.0, 128
        %1393 = vxpose.xlu0.b32.end [16/16] 0.0, 128
        %v1394 = vpop.trf.xlu0
        %v1395 = vpop.trf.xlu0
        %v1396 = vpop.trf.xlu0
        %v1397 = vpop.trf.xlu0
        %v1398 = vpop.trf.xlu0
        %v1399 = vpop.trf.xlu0
        %v1400 = vpop.trf.xlu0
        %v1401 = vpop.trf.xlu0
        %v1402 = vpop.trf.xlu0
        %v1403 = vpop.trf.xlu0
        %v1404 = vpop.trf.xlu0
        %v1405 = vpop.trf.xlu0
        %v1406 = vpop.trf.xlu0
        %v1407 = vpop.trf.xlu0
        %v1408 = vpop.trf.xlu0
        %v1409 = vpop.trf.xlu0
        %v1410 = vperm.slane %v1394, 0
        %1412 = vset.pattern.permute.xlu0 0
        %1413 = vperm.xlu0 %1412, %v1373
        %v1414 = vpop.permute.xlu0 %1413
        %1417 = vset.pattern.permute.xlu0 0
        %1418 = vperm.xlu0 %1417, %v1376
        %v1419 = vpop.permute.xlu0 %1418
        %vm1421 = vcmp.gt.f32.partialorder %v1410, %v1414
        %vm1422 = vcmp.gt.f32.partialorder %v1410, %v1419
        %vm1423 = vcmp.eq.f32.partialorder %v1410, %v1414
        %vm1424 = vcmp.eq.f32.partialorder %v1410, %v1419
        %vm1425 = vmand %vm1423, %vm1016
        %vm1426 = vmand %vm1424, %vm1017
        %vm1427 = vmor %vm1421, %vm1425
        %vm1428 = vmor %vm1422, %vm1426
        %v1429 = vsel %vm1427, 1, 0
        %v1430 = vsel %vm1428, 1, 0
        %v1431 = vcvt.s32.f32 %v1429
        %v1432 = vcvt.s32.f32 %v1430
        %v1433 = vmul.f32 %v1431, %v1172
        %v1434 = vmul.f32 %v1432, %v1172
        %v1435 = vsel %vm770, %v1433, 0.0
        %1436 = vadd.xlane.f32.xlu0 %v1435
        %v1437 = vpop.xlane.xlu0 %1436
        %v1438 = vsel %vm770, %v1434, 0.0
        %1439 = vadd.xlane.f32.xlu0 %v1438
        %v1440 = vpop.xlane.xlu0 %1439
        %v1441 = vmul.f32 %v1111, 0.5
        %v1442 = vceil.f32 %v1441
        %vm1443 = vcmp.lt.f32.partialorder %v1437, %v1442
        %vm1444 = vcmp.lt.f32.partialorder %v1440, %v1442
        %vm1445 = vmand %vm1443, %vm1080
        %vm1446 = vmand %vm1444, %vm1081
        %v1447 = vsel %vm1445, 1.0, 0.0
        %v1448 = vsel %vm1446, 1.0, 0.0
        %v1449 = vtanh.pop %v1373
        %v1450 = vtanh.pop %v1376
        %1452 = vset.pattern.permute.xlu0 0
        %1453 = vperm.xlu0 %1452, %v1449
        %v1454 = vpop.permute.xlu0 %1453
        %1457 = vset.pattern.permute.xlu0 0
        %1458 = vperm.xlu0 %1457, %v1450
        %v1459 = vpop.permute.xlu0 %1458
        %v1461 = vmul.f32 %v1316, %v1454
        %v1462 = vmul.f32 %v1317, %v1459
        %1464 = vset.pattern.permute.xlu0 0
        %1465 = vperm.xlu0 %1464, %v1447
        %v1466 = vpop.permute.xlu0 %1465
        %1469 = vset.pattern.permute.xlu0 0
        %1470 = vperm.xlu0 %1469, %v1448
        %v1471 = vpop.permute.xlu0 %1470
        %v1473 = vmul.f32 %v1461, %v1466
        %v1474 = vmul.f32 %v1462, %v1471
        %vm1475 = vcmp.gt.f32.partialorder %v1447, 0.0
        %vm1476 = vcmp.gt.f32.partialorder %v1448, 0.0
        %v1477 = vsel %vm1475, 1, 0
        %v1478 = vsel %vm1476, 1, 0
        %1479 = vset.pattern.permute.xlu0 0
        %1480 = vperm.xlu0 %1479, %v1477
        %v1481 = vpop.permute.xlu0 %1480
        %1482 = vset.pattern.permute.xlu0 0
        %1483 = vperm.xlu0 %1482, %v1478
        %v1484 = vpop.permute.xlu0 %1483
        %vm1485 = vcmp.eq.s32.totalorder %v1481, 1
        %vm1486 = vcmp.eq.s32.totalorder %v1484, 1
        %v1487 = vsel %vm1485, %v1473, -1e+30
        %v1488 = vsel %vm1486, %v1474, -1e+30
        %v1489 = vsel %vm912, %v1487, -inf
        %v1490 = vsel %vm912, %v1488, -inf
        %v1491 = vmax.f32 %v1489, %v1490
        %v1492 = vrot.slane %v1491, 4
        %v1493 = vmax.f32 %v1491, %v1492
        %v1494 = vrot.slane %v1493, 2
        %v1495 = vmax.f32 %v1493, %v1494
        %v1496 = vrot.slane %v1495, 1
        %v1497 = vmax.f32 %v1495, %v1496
        %v1498 = vsel %vm1034, %v1447, 0.0
        %v1499 = vsel %vm1034, %v1448, 0.0
        %v1500 = vadd.f32 %v1498, %v1499
        %v1501 = vrot.slane %v1500, 4
        %v1502 = vadd.f32 %v1500, %v1501
        %v1503 = vrot.slane %v1502, 2
        %v1504 = vadd.f32 %v1502, %v1503
        %v1505 = vrot.slane %v1504, 1
        %v1506 = vadd.f32 %v1504, %v1505
        %v1507 = vmax.f32 %v1506, 1.0
        %v1508 = vrcp.pop %v1507
        %v1509 = vsel %vm912, %v1473, 0.0
        %v1510 = vsel %vm912, %v1474, 0.0
        %v1511 = vadd.f32 %v1509, %v1510
        %v1512 = vrot.slane %v1511, 4
        %v1513 = vadd.f32 %v1511, %v1512
        %v1514 = vrot.slane %v1513, 2
        %v1515 = vadd.f32 %v1513, %v1514
        %v1516 = vrot.slane %v1515, 1
        %v1517 = vadd.f32 %v1515, %v1516
        %1519 = vset.pattern.permute.xlu0 0
        %1520 = vperm.xlu0 %1519, %v1508
        %v1521 = vpop.permute.xlu0 %1520
        %v1523 = vmul.f32 %v1517, %v1521
        %vm1524 = vcmp.gt.f32.partialorder %v1506, 0.0
        %v1525 = vsel %vm1524, 1.0, 0.0
        %1527 = vset.pattern.permute.xlu0 0
        %1528 = vperm.xlu0 %1527, %v1525
        %v1529 = vpop.permute.xlu0 %1528
        %v1531 = vmul.f32 %v1497, %v1529
        %v1532 = vmul.f32 %v1523, %v1529
        %1533 = vxpose.xlu0.b32.start [1/16] %v1447, 128
        %1534 = vxpose.xlu0.b32.cont [2/16] %v1448, 128
        %1535 = vxpose.xlu0.b32.cont [3/16] 0.0, 128
        %1536 = vxpose.xlu0.b32.cont [4/16] 0.0, 128
        %1537 = vxpose.xlu0.b32.cont [5/16] 0.0, 128
        %1538 = vxpose.xlu0.b32.cont [6/16] 0.0, 128
        %1539 = vxpose.xlu0.b32.cont [7/16] 0.0, 128
        %1540 = vxpose.xlu0.b32.cont [8/16] 0.0, 128
        %1541 = vxpose.xlu0.b32.cont [9/16] 0.0, 128
        %1542 = vxpose.xlu0.b32.cont [10/16] 0.0, 128
        %1543 = vxpose.xlu0.b32.cont [11/16] 0.0, 128
        %1544 = vxpose.xlu0.b32.cont [12/16] 0.0, 128
        %1545 = vxpose.xlu0.b32.cont [13/16] 0.0, 128
        %1546 = vxpose.xlu0.b32.cont [14/16] 0.0, 128
        %1547 = vxpose.xlu0.b32.cont [15/16] 0.0, 128
        %1548 = vxpose.xlu0.b32.end [16/16] 0.0, 128
        %v1549 = vpop.trf.xlu0
        %v1550 = vpop.trf.xlu0
        %v1551 = vpop.trf.xlu0
        %v1552 = vpop.trf.xlu0
        %v1553 = vpop.trf.xlu0
        %v1554 = vpop.trf.xlu0
        %v1555 = vpop.trf.xlu0
        %v1556 = vpop.trf.xlu0
        %v1557 = vpop.trf.xlu0
        %v1558 = vpop.trf.xlu0
        %v1559 = vpop.trf.xlu0
        %v1560 = vpop.trf.xlu0
        %v1561 = vpop.trf.xlu0
        %v1562 = vpop.trf.xlu0
        %v1563 = vpop.trf.xlu0
        %v1564 = vpop.trf.xlu0
        %v1565 = vmul.f32 %v702, %v1466
        %v1566 = vmul.f32 %v703, %v1471
        %v1567 = vperm.slane %v1549, 0
        %v1568 = vmul.f32 %v1565, %v1567
        %v1569 = vmul.f32 %v1566, %v1567
        %v1570 = vmul.f32 %v717, %v1466
        %v1571 = vmul.f32 %v718, %v1471
        %v1572 = vadd.f32 %v1568, %v1570
        %v1573 = vadd.f32 %v1569, %v1571
        %v1574 = vsel %vm770, %v1572, 0.0
        %1575 = vadd.xlane.f32.xlu0 %v1574
        %v1576 = vpop.xlane.xlu0 %1575
        %v1577 = vsel %vm770, %v1573, 0.0
        %1578 = vadd.xlane.f32.xlu0 %v1577
        %v1579 = vpop.xlane.xlu0 %1578
        %vm1580 = vcmp.gt.f32.partialorder %v1576, 0.0
        %vm1581 = vcmp.gt.f32.partialorder %v1579, 0.0
        %v1582 = vmax.f32 %v1576, 1e-12
        %v1583 = vmax.f32 %v1579, 1e-12
        %v1584 = vrsqrt.pop %v1582
        %v1585 = vmul.f32 %v1584, %v1582
        %v1586 = vmul.f32 %v1585, %v1584
        %v1587 = vmul.f32 0.5, %v1586
        %v1588 = vsub.f32 1.5, %v1587
        %v1589 = vmul.f32 %v1584, %v1588
        %vm1590 = vweird.f32 %v1582
        %vm1591 = vweird.f32 %v1584
        %vm1592 = vmor %vm1590, %vm1591
        %v1593 = vsel %vm1592, %v1584, %v1589
        %v1594 = vrsqrt.pop %v1583
        %v1595 = vmul.f32 %v1594, %v1583
        %v1596 = vmul.f32 %v1595, %v1594
        %v1597 = vmul.f32 0.5, %v1596
        %v1598 = vsub.f32 1.5, %v1597
        %v1599 = vmul.f32 %v1594, %v1598
        %vm1600 = vweird.f32 %v1583
        %vm1601 = vweird.f32 %v1594
        %vm1602 = vmor %vm1600, %vm1601
        %v1603 = vsel %vm1602, %v1594, %v1599
        %v1604 = vsel %vm1580, %v1593, 0.0
        %v1605 = vsel %vm1581, %v1603, 0.0
        %v1606 = vmul.f32 %v1572, %v1604
        %v1607 = vmul.f32 %v1573, %v1605
        %1608 = vxpose.xlu0.b32.start [1/16] %v1604, 128
        %1609 = vxpose.xlu0.b32.cont [2/16] %v1605, 128
        %1610 = vxpose.xlu0.b32.cont [3/16] 0.0, 128
        %1611 = vxpose.xlu0.b32.cont [4/16] 0.0, 128
        %1612 = vxpose.xlu0.b32.cont [5/16] 0.0, 128
        %1613 = vxpose.xlu0.b32.cont [6/16] 0.0, 128
        %1614 = vxpose.xlu0.b32.cont [7/16] 0.0, 128
        %1615 = vxpose.xlu0.b32.cont [8/16] 0.0, 128
        %1616 = vxpose.xlu0.b32.cont [9/16] 0.0, 128
        %1617 = vxpose.xlu0.b32.cont [10/16] 0.0, 128
        %1618 = vxpose.xlu0.b32.cont [11/16] 0.0, 128
        %1619 = vxpose.xlu0.b32.cont [12/16] 0.0, 128
        %1620 = vxpose.xlu0.b32.cont [13/16] 0.0, 128
        %1621 = vxpose.xlu0.b32.cont [14/16] 0.0, 128
        %1622 = vxpose.xlu0.b32.cont [15/16] 0.0, 128
        %1623 = vxpose.xlu0.b32.end [16/16] 0.0, 128
        %v1624 = vpop.trf.xlu0
        %v1625 = vpop.trf.xlu0
        %v1626 = vpop.trf.xlu0
        %v1627 = vpop.trf.xlu0
        %v1628 = vpop.trf.xlu0
        %v1629 = vpop.trf.xlu0
        %v1630 = vpop.trf.xlu0
        %v1631 = vpop.trf.xlu0
        %v1632 = vpop.trf.xlu0
        %v1633 = vpop.trf.xlu0
        %v1634 = vpop.trf.xlu0
        %v1635 = vpop.trf.xlu0
        %v1636 = vpop.trf.xlu0
        %v1637 = vpop.trf.xlu0
        %v1638 = vpop.trf.xlu0
        %v1639 = vpop.trf.xlu0
        %v1640 = vperm.slane %v1624, 0
        %v1641 = vmul.f32 %v1606, %v1640
        %v1642 = vmul.f32 %v1607, %v1640
        %v1643 = vld [vmem:[%s11] sm:$0xff]
        %v1644 = vld [vmem:[%s11 + $0x8] sm:$0xff]
        %v1645 = vld [vmem:[%s11 + $0x10] sm:$0xff]
        %v1646 = vld [vmem:[%s11 + $0x18] sm:$0xff]
        %v1648 = vsel %vm912, %v1473, 0
        %v1651 = vsel %vm912, %v1474, 0
        %1653 = vmatpush.msra.mxu0 0.0
        %1654 = vmatpush.msra.mxu0 0.0
        %1655 = vmatpush.msra.mxu0 0.0
        %1656 = vmatpush.msra.mxu0 0.0
        %1657 = vmatpush.msra.mxu0 0.0
        %1658 = vmatpush.msra.mxu0 0.0
        %1659 = vmatpush.msra.mxu0 0.0
        %1660 = vmatpush.msra.mxu0 0.0
        %1661 = vmatpush.msra.mxu0 0.0
        %1662 = vmatpush.msra.mxu0 0.0
        %1663 = vmatpush.msra.mxu0 0.0
        %1664 = vmatpush.msra.mxu0 0.0
        %1665 = vmatpush.msra.mxu0 %v1646
        %1666 = vmatpush.msra.mxu0 %v1645
        %1667 = vmatpush.msra.mxu0 %v1644
        %1668 = vmatpush.msra.mxu0 %v1643
        %1669 = vmatmul.f32.gmra.mxu0 %v1648
        %v1670 = vpop.f32.mrf.mxu0
        %v1671 = vadd.f32 0.0, %v1670
        %1672 = vmatmul.f32.gmra.mxu0 %v1651
        %v1673 = vpop.f32.mrf.mxu0
        %v1674 = vadd.f32 0.0, %v1673
        %1675 = vdwg.mxu0
        %v1676 = vld [vmem:[%s12] sm:$0x1]
        %v1678 = vperm.slane %v1676, 0
        %v1681 = vsel %vm770, %v1641, 0
        %v1684 = vsel %vm770, %v1642, 0
        %1686 = vmatpush.msra.mxu0 0.0
        %1687 = vmatpush.msra.mxu0 0.0
        %1688 = vmatpush.msra.mxu0 0.0
        %1689 = vmatpush.msra.mxu0 0.0
        %1690 = vmatpush.msra.mxu0 0.0
        %1691 = vmatpush.msra.mxu0 0.0
        %1692 = vmatpush.msra.mxu0 0.0
        %1693 = vmatpush.msra.mxu0 0.0
        %1694 = vmatpush.msra.mxu0 0.0
        %1695 = vmatpush.msra.mxu0 0.0
        %1696 = vmatpush.msra.mxu0 0.0
        %1697 = vmatpush.msra.mxu0 0.0
        %1698 = vmatpush.msra.mxu0 0.0
        %1699 = vmatpush.msra.mxu0 0.0
        %1700 = vmatpush.msra.mxu0 %v1674
        %1701 = vmatpush.msra.mxu0 %v1671
        %1702 = vmatmul.f32.gmra.mxu0 %v1681
        %v1703 = vpop.f32.mrf.mxu0
        %v1704 = vadd.f32 %v1678, %v1703
        %1705 = vmatmul.f32.gmra.mxu0 %v1684
        %v1706 = vpop.f32.mrf.mxu0
        %v1707 = vadd.f32 %v1678, %v1706
        %1708 = vdwg.mxu0
        %v1709 = vmax.f32 %v1704, 0.0
        %v1710 = vmax.f32 %v1707, 0.0
        %v1711 = vmul.f32 %v1709, %v1466
        %v1712 = vmul.f32 %v1710, %v1471
        %v1713 = vld [vmem:[%s13] sm:$0xff]
        %v1714 = vld [vmem:[%s13 + $0x8] sm:$0xff]
        %v1715 = vld [vmem:[%s13 + $0x10] sm:$0xff]
        %v1716 = vld [vmem:[%s13 + $0x18] sm:$0xff]
        %v1718 = vsel %vm912, %v1711, 0
        %v1721 = vsel %vm912, %v1712, 0
        %1723 = vmatpush.msra.mxu0 0.0
        %1724 = vmatpush.msra.mxu0 0.0
        %1725 = vmatpush.msra.mxu0 0.0
        %1726 = vmatpush.msra.mxu0 0.0
        %1727 = vmatpush.msra.mxu0 0.0
        %1728 = vmatpush.msra.mxu0 0.0
        %1729 = vmatpush.msra.mxu0 0.0
        %1730 = vmatpush.msra.mxu0 0.0
        %1731 = vmatpush.msra.mxu0 0.0
        %1732 = vmatpush.msra.mxu0 0.0
        %1733 = vmatpush.msra.mxu0 0.0
        %1734 = vmatpush.msra.mxu0 0.0
        %1735 = vmatpush.msra.mxu0 %v1716
        %1736 = vmatpush.msra.mxu0 %v1715
        %1737 = vmatpush.msra.mxu0 %v1714
        %1738 = vmatpush.msra.mxu0 %v1713
        %1739 = vmatmul.f32.gmra.mxu0 %v1718
        %v1740 = vpop.f32.mrf.mxu0
        %v1741 = vadd.f32 0.0, %v1740
        %1742 = vmatmul.f32.gmra.mxu0 %v1721
        %v1743 = vpop.f32.mrf.mxu0
        %v1744 = vadd.f32 0.0, %v1743
        %1745 = vdwg.mxu0
        %v1746 = vld [vmem:[#allocation4] sm:$0x1]
        %v1748 = vperm.slane %v1746, 0
        %1750 = vmatpush.msra.mxu0 0.0
        %1751 = vmatpush.msra.mxu0 0.0
        %1752 = vmatpush.msra.mxu0 0.0
        %1753 = vmatpush.msra.mxu0 0.0
        %1754 = vmatpush.msra.mxu0 0.0
        %1755 = vmatpush.msra.mxu0 0.0
        %1756 = vmatpush.msra.mxu0 0.0
        %1757 = vmatpush.msra.mxu0 0.0
        %1758 = vmatpush.msra.mxu0 0.0
        %1759 = vmatpush.msra.mxu0 0.0
        %1760 = vmatpush.msra.mxu0 0.0
        %1761 = vmatpush.msra.mxu0 0.0
        %1762 = vmatpush.msra.mxu0 0.0
        %1763 = vmatpush.msra.mxu0 0.0
        %1764 = vmatpush.msra.mxu0 %v1744
        %1765 = vmatpush.msra.mxu0 %v1741
        %1766 = vmatmul.f32.gmra.mxu0 %v1681
        %v1767 = vpop.f32.mrf.mxu0
        %v1768 = vadd.f32 %v1748, %v1767
        %1769 = vmatmul.f32.gmra.mxu0 %v1684
        %v1770 = vpop.f32.mrf.mxu0
        %v1771 = vadd.f32 %v1748, %v1770
        %1772 = vdwg.mxu0
        %1773 = vxpose.xlu0.b32.start [1/16] %v1768, 128
        %1774 = vxpose.xlu0.b32.cont [2/16] %v1771, 128
        %1775 = vxpose.xlu0.b32.cont [3/16] 0.0, 128
        %1776 = vxpose.xlu0.b32.cont [4/16] 0.0, 128
        %1777 = vxpose.xlu0.b32.cont [5/16] 0.0, 128
        %1778 = vxpose.xlu0.b32.cont [6/16] 0.0, 128
        %1779 = vxpose.xlu0.b32.cont [7/16] 0.0, 128
        %1780 = vxpose.xlu0.b32.cont [8/16] 0.0, 128
        %1781 = vxpose.xlu0.b32.cont [9/16] 0.0, 128
        %1782 = vxpose.xlu0.b32.cont [10/16] 0.0, 128
        %1783 = vxpose.xlu0.b32.cont [11/16] 0.0, 128
        %1784 = vxpose.xlu0.b32.cont [12/16] 0.0, 128
        %1785 = vxpose.xlu0.b32.cont [13/16] 0.0, 128
        %1786 = vxpose.xlu0.b32.cont [14/16] 0.0, 128
        %1787 = vxpose.xlu0.b32.cont [15/16] 0.0, 128
        %1788 = vxpose.xlu0.b32.end [16/16] 0.0, 128
        %v1789 = vpop.trf.xlu0
        %v1790 = vpop.trf.xlu0
        %v1791 = vpop.trf.xlu0
        %v1792 = vpop.trf.xlu0
        %v1793 = vpop.trf.xlu0
        %v1794 = vpop.trf.xlu0
        %v1795 = vpop.trf.xlu0
        %v1796 = vpop.trf.xlu0
        %v1797 = vpop.trf.xlu0
        %v1798 = vpop.trf.xlu0
        %v1799 = vpop.trf.xlu0
        %v1800 = vpop.trf.xlu0
        %v1801 = vpop.trf.xlu0
        %v1802 = vpop.trf.xlu0
        %v1803 = vpop.trf.xlu0
        %v1804 = vpop.trf.xlu0
        %v1805 = vperm.slane %v1789, 0
        %1807 = vset.pattern.permute.xlu0 0
        %1808 = vperm.xlu0 %1807, %v1768
        %v1809 = vpop.permute.xlu0 %1808
        %1812 = vset.pattern.permute.xlu0 0
        %1813 = vperm.xlu0 %1812, %v1771
        %v1814 = vpop.permute.xlu0 %1813
        %vm1816 = vcmp.gt.f32.partialorder %v1805, %v1809
        %vm1817 = vcmp.gt.f32.partialorder %v1805, %v1814
        %vm1818 = vcmp.eq.f32.partialorder %v1805, %v1809
        %vm1819 = vcmp.eq.f32.partialorder %v1805, %v1814
        %vm1820 = vmand %vm1818, %vm1016
        %vm1821 = vmand %vm1819, %vm1017
        %vm1822 = vmor %vm1816, %vm1820
        %vm1823 = vmor %vm1817, %vm1821
        %v1824 = vsel %vm1822, 1, 0
        %v1825 = vsel %vm1823, 1, 0
        %v1826 = vcvt.s32.f32 %v1824
        %v1827 = vcvt.s32.f32 %v1825
        %v1828 = vmul.f32 %v1826, %v1567
        %v1829 = vmul.f32 %v1827, %v1567
        %v1830 = vsel %vm770, %v1828, 0.0
        %1831 = vadd.xlane.f32.xlu0 %v1830
        %v1832 = vpop.xlane.xlu0 %1831
        %v1833 = vsel %vm770, %v1829, 0.0
        %1834 = vadd.xlane.f32.xlu0 %v1833
        %v1835 = vpop.xlane.xlu0 %1834
        %v1836 = vmul.f32 %v1506, 0.5
        %v1837 = vceil.f32 %v1836
        %vm1838 = vcmp.lt.f32.partialorder %v1832, %v1837
        %vm1839 = vcmp.lt.f32.partialorder %v1835, %v1837
        %vm1840 = vmand %vm1838, %vm1475
        %vm1841 = vmand %vm1839, %vm1476
        %v1842 = vsel %vm1840, 1.0, 0.0
        %v1843 = vsel %vm1841, 1.0, 0.0
        %v1844 = vtanh.pop %v1768
        %v1845 = vtanh.pop %v1771
        %1847 = vset.pattern.permute.xlu0 0
        %1848 = vperm.xlu0 %1847, %v1844
        %v1849 = vpop.permute.xlu0 %1848
        %1852 = vset.pattern.permute.xlu0 0
        %1853 = vperm.xlu0 %1852, %v1845
        %v1854 = vpop.permute.xlu0 %1853
        %v1856 = vmul.f32 %v1711, %v1849
        %v1857 = vmul.f32 %v1712, %v1854
        %1859 = vset.pattern.permute.xlu0 0
        %1860 = vperm.xlu0 %1859, %v1842
        %v1861 = vpop.permute.xlu0 %1860
        %1864 = vset.pattern.permute.xlu0 0
        %1865 = vperm.xlu0 %1864, %v1843
        %v1866 = vpop.permute.xlu0 %1865
        %v1868 = vmul.f32 %v1856, %v1861
        %v1869 = vmul.f32 %v1857, %v1866
        %vm1870 = vcmp.gt.f32.partialorder %v1842, 0.0
        %vm1871 = vcmp.gt.f32.partialorder %v1843, 0.0
        %v1872 = vsel %vm1870, 1, 0
        %v1873 = vsel %vm1871, 1, 0
        %1874 = vset.pattern.permute.xlu0 0
        %1875 = vperm.xlu0 %1874, %v1872
        %v1876 = vpop.permute.xlu0 %1875
        %1877 = vset.pattern.permute.xlu0 0
        %1878 = vperm.xlu0 %1877, %v1873
        %v1879 = vpop.permute.xlu0 %1878
        %vm1880 = vcmp.eq.s32.totalorder %v1876, 1
        %vm1881 = vcmp.eq.s32.totalorder %v1879, 1
        %v1882 = vsel %vm1880, %v1868, -1e+30
        %v1883 = vsel %vm1881, %v1869, -1e+30
        %v1884 = vsel %vm912, %v1882, -inf
        %v1885 = vsel %vm912, %v1883, -inf
        %v1886 = vmax.f32 %v1884, %v1885
        %v1887 = vrot.slane %v1886, 4
        %v1888 = vmax.f32 %v1886, %v1887
        %v1889 = vrot.slane %v1888, 2
        %v1890 = vmax.f32 %v1888, %v1889
        %v1891 = vrot.slane %v1890, 1
        %v1892 = vmax.f32 %v1890, %v1891
        %v1893 = vsel %vm1034, %v1842, 0.0
        %v1894 = vsel %vm1034, %v1843, 0.0
        %v1895 = vadd.f32 %v1893, %v1894
        %v1896 = vrot.slane %v1895, 4
        %v1897 = vadd.f32 %v1895, %v1896
        %v1898 = vrot.slane %v1897, 2
        %v1899 = vadd.f32 %v1897, %v1898
        %v1900 = vrot.slane %v1899, 1
        %v1901 = vadd.f32 %v1899, %v1900
        %v1902 = vmax.f32 %v1901, 1.0
        %v1903 = vrcp.pop %v1902
        %v1904 = vsel %vm912, %v1868, 0.0
        %v1905 = vsel %vm912, %v1869, 0.0
        %v1906 = vadd.f32 %v1904, %v1905
        %v1907 = vrot.slane %v1906, 4
        %v1908 = vadd.f32 %v1906, %v1907
        %v1909 = vrot.slane %v1908, 2
        %v1910 = vadd.f32 %v1908, %v1909
        %v1911 = vrot.slane %v1910, 1
        %v1912 = vadd.f32 %v1910, %v1911
        %1914 = vset.pattern.permute.xlu0 0
        %1915 = vperm.xlu0 %1914, %v1903
        %v1916 = vpop.permute.xlu0 %1915
        %v1918 = vmul.f32 %v1912, %v1916
        %vm1919 = vcmp.gt.f32.partialorder %v1901, 0.0
        %v1920 = vsel %vm1919, 1.0, 0.0
        %1922 = vset.pattern.permute.xlu0 0
        %1923 = vperm.xlu0 %1922, %v1920
        %v1924 = vpop.permute.xlu0 %1923
        %v1926 = vmul.f32 %v1892, %v1924
        %v1927 = vmul.f32 %v1918, %v1924
        %v1928 = vadd.f32 %v1136, %v1531
        %v1929 = vadd.f32 %v1928, %v1926
        %v1930 = vadd.f32 %v1137, %v1532
        %v1931 = vadd.f32 %v1930, %v1927
        %v1932 = vld [vmem:[%s15] sm:$0xff]
        %v1933 = vld [vmem:[%s15 + $0x8] sm:$0xff]
        %v1934 = vld [vmem:[%s15 + $0x10] sm:$0xff]
        %v1935 = vld [vmem:[%s15 + $0x18] sm:$0xff]
        %v1936 = vld [vmem:[%s15 + $0x20] sm:$0xff]
        %v1937 = vld [vmem:[%s15 + $0x28] sm:$0xff]
        %v1938 = vld [vmem:[%s15 + $0x30] sm:$0xff]
        %v1939 = vld [vmem:[%s15 + $0x38] sm:$0xff]
        %v1941 = vsel %vm912, %v1931, 0
        %1943 = vmatpush.msra.mxu0 0.0
        %1944 = vmatpush.msra.mxu0 0.0
        %1945 = vmatpush.msra.mxu0 0.0
        %1946 = vmatpush.msra.mxu0 0.0
        %1947 = vmatpush.msra.mxu0 0.0
        %1948 = vmatpush.msra.mxu0 0.0
        %1949 = vmatpush.msra.mxu0 0.0
        %1950 = vmatpush.msra.mxu0 0.0
        %1951 = vmatpush.msra.mxu0 0.0
        %1952 = vmatpush.msra.mxu0 0.0
        %1953 = vmatpush.msra.mxu0 0.0
        %1954 = vmatpush.msra.mxu0 0.0
        %1955 = vmatpush.msra.mxu0 %v1939
        %1956 = vmatpush.msra.mxu0 %v1938
        %1957 = vmatpush.msra.mxu0 %v1937
        %1958 = vmatpush.msra.mxu0 %v1936
        %1959 = vmatmul.f32.gmra.mxu0 %v1941
        %v1960 = vpop.f32.mrf.mxu0
        %v1961 = vadd.f32 0.0, %v1960
        %1962 = vdwg.mxu0
        %v1964 = vsel %vm912, %v1929, 0
        %1966 = vmatpush.msra.mxu0 0.0
        %1967 = vmatpush.msra.mxu0 0.0
        %1968 = vmatpush.msra.mxu0 0.0
        %1969 = vmatpush.msra.mxu0 0.0
        %1970 = vmatpush.msra.mxu0 0.0
        %1971 = vmatpush.msra.mxu0 0.0
        %1972 = vmatpush.msra.mxu0 0.0
        %1973 = vmatpush.msra.mxu0 0.0
        %1974 = vmatpush.msra.mxu0 0.0
        %1975 = vmatpush.msra.mxu0 0.0
        %1976 = vmatpush.msra.mxu0 0.0
        %1977 = vmatpush.msra.mxu0 0.0
        %1978 = vmatpush.msra.mxu0 %v1935
        %1979 = vmatpush.msra.mxu0 %v1934
        %1980 = vmatpush.msra.mxu0 %v1933
        %1981 = vmatpush.msra.mxu0 %v1932
        %1982 = vmatmul.f32.gmra.mxu0 %v1964
        %v1983 = vpop.f32.mrf.mxu0
        %v1984 = vadd.f32 %v1961, %v1983
        %1985 = vdwg.mxu0
        %v1986 = vld [vmem:[%s16] sm:$0x1]
        %v1987 = vadd.f32 %v1984, %v1986
        %v1988 = vmax.f32 %v1987, 0.0
        %v1989 = vld [vmem:[%s17] sm:$0xff]
        %v1990 = vld [vmem:[%s17 + $0x8] sm:$0xff]
        %v1991 = vld [vmem:[%s17 + $0x10] sm:$0xff]
        %v1992 = vld [vmem:[%s17 + $0x18] sm:$0xff]
        %v1993 = vld [vmem:[%s18] sm:$0x1]
        %v1995 = vsel %vm912, %v1988, 0
        %1997 = vmatpush.msra.mxu0 0.0
        %1998 = vmatpush.msra.mxu0 0.0
        %1999 = vmatpush.msra.mxu0 0.0
        %2000 = vmatpush.msra.mxu0 0.0
        %2001 = vmatpush.msra.mxu0 0.0
        %2002 = vmatpush.msra.mxu0 0.0
        %2003 = vmatpush.msra.mxu0 0.0
        %2004 = vmatpush.msra.mxu0 0.0
        %2005 = vmatpush.msra.mxu0 0.0
        %2006 = vmatpush.msra.mxu0 0.0
        %2007 = vmatpush.msra.mxu0 0.0
        %2008 = vmatpush.msra.mxu0 0.0
        %2009 = vmatpush.msra.mxu0 %v1992
        %2010 = vmatpush.msra.mxu0 %v1991
        %2011 = vmatpush.msra.mxu0 %v1990
        %2012 = vmatpush.msra.mxu0 %v1989
        %2013 = vmatmul.f32.gmra.mxu0 %v1995
        %v2014 = vpop.f32.mrf.mxu0
        %v2015 = vadd.f32 %v1993, %v2014
        %2016 = vdwg.mxu0
        %v2017 = vmax.f32 %v2015, 0.0
        %v2018 = vld [vmem:[%s19] sm:$0xff]
        %v2019 = vld [vmem:[%s19 + $0x8] sm:$0xff]
        %v2020 = vld [vmem:[%s20] sm:$0x1]
        %v2022 = vsel %vm770, %v2017, 0
        %2024 = vmatpush.msra.mxu0 0.0
        %2025 = vmatpush.msra.mxu0 0.0
        %2026 = vmatpush.msra.mxu0 0.0
        %2027 = vmatpush.msra.mxu0 0.0
        %2028 = vmatpush.msra.mxu0 0.0
        %2029 = vmatpush.msra.mxu0 0.0
        %2030 = vmatpush.msra.mxu0 0.0
        %2031 = vmatpush.msra.mxu0 0.0
        %2032 = vmatpush.msra.mxu0 0.0
        %2033 = vmatpush.msra.mxu0 0.0
        %2034 = vmatpush.msra.mxu0 0.0
        %2035 = vmatpush.msra.mxu0 0.0
        %2036 = vmatpush.msra.mxu0 0.0
        %2037 = vmatpush.msra.mxu0 0.0
        %2038 = vmatpush.msra.mxu0 %v2019
        %2039 = vmatpush.msra.mxu0 %v2018
        %2040 = vmatmul.f32.gmra.mxu0 %v2022
        %v2041 = vpop.f32.mrf.mxu0
        %v2042 = vadd.f32 %v2020, %v2041
        %2043 = vdwg.mxu0
        %vm2044 = vcmask 24576
        %v2045 = vsel %vm2044, %v2042, -inf
        %2046 = vmax.xlane.f32.xlu0 %v2045
        %v2047 = vpop.xlane.xlu0 %2046
        %v2048 = vsub.f32 %v2042, %v2047
        %v2049 = vmul.f32 %v2048, 1.442695
        %v2050 = vpow.pop %v2049
        %v2051 = vsel %vm2044, %v2050, 0.0
        %2052 = vadd.xlane.f32.xlu0 %v2051
        %v2053 = vpop.xlane.xlu0 %2052
        %v2054 = vlog2.pop %v2053
        %v2055 = vmul.f32 %v2054, 0.6931472
        %v2056 = vsub.f32 %v2048, %v2055
        %2057 = vst.msk [vmem:[%s684] sm:$0x1] %vm2044, %v2056
        %s2058 = sand.u32 %s505, 1
        %s2059 = scalar_lea.sflag [#allocation6], %s2058
        %s2060 = sand.u32 %s505, 1
        %s2061 = scalar_lea.vmem [#allocation5], %s2060
        // Predicated region
        $region105: #{tpu_custom_call.1} parent=103 // pred_check
          %p2062 = pneg %p515
        $region106: #{tpu_custom_call.1} parent=103 // pred_check_branch
          %2064 = sbr.rel (%p2062) target = $region108
        $region107: #{tpu_custom_call.1} parent=103 // pred_region
          %2066 = vsyncadd %s2059, 0
          %s2067 = scalar_lea.hbm %s21, %s41
          %s2069 = sshll.u32 %s2061, 4
          %s2070 = int_to_ptr.vmem [resolvable:$true] %s2069
          %s2071 = sshll.u32 %s2067, 4
          %s2072 = int_to_ptr.hbm [resolvable:$true] %s2071
          %2074 = dma.vmem_to_hbm [thread:$0]  %s2070, 16, %s2072, %s2059
        $region108: #{tpu_custom_call.1} parent=103 // pred_fallthru
          _
      $region104: #{tpu_custom_call.1} parent=5 // pred_fallthru
        _
      %p2075 = scmp.le.s32.totalorder 2, %s36
      // Predicated region
      $region109: #{tpu_custom_call.1} parent=5 // pred_check
        %p2076 = pneg %p2075
      $region110: #{tpu_custom_call.1} parent=5 // pred_check_branch
        %2078 = sbr.rel (%p2076) target = $region112
      $region111: #{tpu_custom_call.1} parent=5 // pred_region
        %s2079 = ssub.s32 %s36, 2
        // Predicated region
        $region113: #{tpu_custom_call.1} parent=111 // pred_check
          %p2080 = pneg %p521
        $region114: #{tpu_custom_call.1} parent=111 // pred_check_branch
          %2082 = sbr.rel (%p2080) target = $region116
        $region115: #{tpu_custom_call.1} parent=111 // pred_region
          %s2083 = sand.u32 %s506, 1
          %s2084 = scalar_lea.sflag [#allocation6], %s2083
          %s2085 = sand.u32 %s506, 1
          %s2086 = scalar_lea.vmem [#allocation5], %s2085
          %2088 = dma.done %s2084, 16
        $region116: #{tpu_custom_call.1} parent=111 // pred_fallthru
          _
      $region112: #{tpu_custom_call.1} parent=5 // pred_fallthru
        _
    $region6: #{tpu_custom_call.1} parent=1 // loop_footer
      %s40 = sadd.s32 1, %s36
    $region7: #{tpu_custom_call.1} parent=1 // loop_footer_branch
      %35 = sbr.rel target = $region3
    $region8: #{tpu_custom_call.1} parent=1 // loop_exit
      _
    %2089 = vsyncpa [#allocation6], 1
    %s2090 = scalar_lea.sflag [#allocation6], 1
    %2091 = vsyncpa %s2090, 1

</llo_original>
